<compile_context>
chip_gen: v5e
topology: v5e:2x2
jax: 0.10.0
libtpu: 0.0.40
codegen_flags: <defaults>
</compile_context>

<pallas_src>
import functools
import math

import jax
import jax.numpy as jnp
from jax.experimental import pallas as pl
from jax.experimental.pallas import tpu as pltpu

EPS = 1e-5          # nn.BatchNorm2d default eps
BF16 = jnp.bfloat16
F32 = jnp.float32


def _round_up(x, m):
    return ((x + m - 1) // m) * m


def _group_factor(k, p):
    """Smallest G with G*k % 128 == 0 and G*p % 128 == 0 (lane-dense grouping)."""
    gk = 128 // math.gcd(k, 128)
    gp = 128 // math.gcd(p, 128)
    return (gk * gp) // math.gcd(gk, gp)


# --------------------------------------------------------------------------
# pass 1: per-channel sum / sumsq of conv1 output (grouped layout).
# Zero-padded rows contribute exactly zero, so no mask / correction is needed.
# Partial sums live in row 0 of an (8, GP) per-core accumulator block.
# --------------------------------------------------------------------------
def _stats1_kernel(xg_ref, w1_ref, sum_ref, sq_ref):
    @pl.when(pl.program_id(1) == 0)
    def _():
        sum_ref[...] = jnp.zeros_like(sum_ref)
        sq_ref[...] = jnp.zeros_like(sq_ref)

    y1 = jnp.dot(xg_ref[...], w1_ref[...], preferred_element_type=jnp.float32)
    sum_ref[0:1, :] += jnp.sum(y1, axis=0, keepdims=True)
    sq_ref[0:1, :] += jnp.sum(y1 * y1, axis=0, keepdims=True)


# --------------------------------------------------------------------------
# pass 2: per-channel sum / sumsq of conv2 output.  conv1 is recomputed with
# BN1's scale folded into the weight (w1f) and the shift added in f32.
# Padded-row contributions are removed analytically in the wrapper.
# --------------------------------------------------------------------------
def _stats2_kernel(xg_ref, w1f_ref, w2_ref, sh1_ref, sum_ref, sq_ref):
    @pl.when(pl.program_id(1) == 0)
    def _():
        sum_ref[...] = jnp.zeros_like(sum_ref)
        sq_ref[...] = jnp.zeros_like(sq_ref)

    y1 = jnp.dot(xg_ref[...], w1f_ref[...], preferred_element_type=jnp.float32)
    y1 = jnp.maximum(y1 + sh1_ref[...], 0.0)
    y2 = jnp.dot(y1.astype(jnp.bfloat16), w2_ref[...],
                 preferred_element_type=jnp.float32)
    sum_ref[0:1, :] += jnp.sum(y2, axis=0, keepdims=True)
    sq_ref[0:1, :] += jnp.sum(y2 * y2, axis=0, keepdims=True)


# --------------------------------------------------------------------------
# pass 3: full forward with both BN scales folded into the weights, residual
# via a 0/1 block-diagonal scatter matmul (bf16, exact values), ReLU,
# lane-dense f32 store.
# --------------------------------------------------------------------------
def _final_kernel(xg_ref, w1f_ref, w2f_ref, s_ref, sh1_ref, sh2_ref, o_ref):
    xg = xg_ref[...]
    y1 = jnp.dot(xg, w1f_ref[...], preferred_element_type=jnp.float32)
    y1 = jnp.maximum(y1 + sh1_ref[...], 0.0)
    y2 = jnp.dot(y1.astype(jnp.bfloat16), w2f_ref[...],
                 preferred_element_type=jnp.float32)
    y2 = y2 + sh2_ref[...]
    ident = jnp.dot(xg, s_ref[...], preferred_element_type=jnp.float32)
    o_ref[...] = jnp.maximum(y2 + ident, 0.0)


def basic_block_forward(x_nchw, w1t, w2t, g1, b1, g2, b2,
                        *, kernel_size: int, planes: int, tile_mg: int = 2048):
    """x_nchw: (N, 1, H, kernel_size) float32.  Returns (N, 1, H, planes) f32."""
    N, C, H, W = x_nchw.shape
    assert C == 1 and W == kernel_size
    K, P = kernel_size, planes
    concat_identity = K != P
    if concat_identity:
        assert 2 * K == P

    M = N * H
    G = _group_factor(K, P)          # 16 for (K, P) = (8, 16)
    GK, GP = G * K, G * P            # lane-dense last dims (multiples of 128)

    ROW_GRANULE = 16                 # bf16 sublane tile
    mg_needed = -(-M // G)
    tile_mg = _round_up(
        max(ROW_GRANULE, min(tile_mg, _round_up(mg_needed, ROW_GRANULE))),
        ROW_GRANULE)
    num_tiles = -(-mg_needed // tile_mg)
    # Prefer >= 2 grid steps so the "parallel" axes shard across v7x's 2 TCs.
    if num_tiles == 1 and mg_needed > ROW_GRANULE:
        tile_mg = _round_up(-(-mg_needed // 2), ROW_GRANULE)
        num_tiles = -(-mg_needed // tile_mg)
    num_cores = 2 if num_tiles >= 2 else 1
    num_tiles = _round_up(num_tiles, num_cores)
    tiles_per_core = num_tiles // num_cores
    MG = num_tiles * tile_mg
    M_pad = MG * G
    n_pad = M_pad - M

    # ---- grouped, bf16 input (single boundary relayout, fused with the cast)
    xf = x_nchw.reshape(M, K).astype(BF16)
    if M_pad != M:
        xf = jnp.pad(xf, ((0, M_pad - M), (0, 0)))
    xg = xf.reshape(MG, GK)

    eye_g = jnp.eye(G, dtype=F32)

    def blk(small_f32):
        """(K|P, P) -> block-diagonal grouped weight, bf16."""
        return jnp.kron(eye_g, small_f32).astype(BF16)

    w1_blk = blk(w1t.astype(F32))                                   # (GK, GP)
    w2_blk = blk(w2t.astype(F32))                                   # (GP, GP)
    s0 = (jnp.concatenate([jnp.eye(K, dtype=F32), jnp.eye(K, dtype=F32)], axis=1)
          if concat_identity else jnp.eye(K, dtype=F32))            # (K, P)
    s_blk = blk(s0)                                                 # (GK, GP)

    # ---- specs ----
    def stream_spec2(cols):      # streamed xg tile, (core, tile) grid
        return pl.BlockSpec((tile_mg, cols),
                            lambda c, i: (c * tiles_per_core + i, 0))

    def resident2(shape):        # resident operand, (core, tile) grid
        return pl.BlockSpec(shape, lambda c, i: (0, 0))

    def stream_spec1(cols):      # streamed tile, flat grid (pass 3)
        return pl.BlockSpec((tile_mg, cols), lambda i: (i, 0))

    def resident1(shape):
        return pl.BlockSpec(shape, lambda i: (0, 0))

    # Per-core partial accumulators: (8, GP) block per core, data in row 0.
    stats_out_specs = [pl.BlockSpec((8, GP), lambda c, i: (c, 0))] * 2
    stats_out_shape = (jax.ShapeDtypeStruct((8 * num_cores, GP), F32),) * 2
    stats_sem = ("parallel", "arbitrary")
    vmem_limit = 32 * 1024 * 1024

    def finalize(sum_v, sq_v, corr_s=None, corr_ss=None):
        s = sum_v.sum(axis=0).reshape(G, P).sum(axis=0)
        ss = sq_v.sum(axis=0).reshape(G, P).sum(axis=0)
        if corr_s is not None:
            s = s - corr_s
            ss = ss - corr_ss
        mean = s / M
        var = jnp.maximum(ss / M - mean * mean, 0.0)
        return mean, var

    def affine(mean, var, gamma, beta):
        scale = gamma.astype(F32) * jax.lax.rsqrt(var + EPS)
        shift = beta.astype(F32) - mean * scale
        return scale, shift

    # -------------------- pass 1: stats of conv1 output --------------------
    sum1, sq1 = pl.pallas_call(
        _stats1_kernel,
        grid=(num_cores, tiles_per_core),
        in_specs=[stream_spec2(GK), resident2((GK, GP))],
        out_specs=stats_out_specs,
        out_shape=stats_out_shape,
        compiler_params=pltpu.CompilerParams(
            dimension_semantics=stats_sem, vmem_limit_bytes=vmem_limit),
        cost_estimate=pl.CostEstimate(
            flops=2 * MG * GK * GP + 3 * MG * GP,
            transcendentals=0,
            bytes_accessed=2 * MG * GK + 2 * GK * GP
            + 4 * 2 * 8 * num_cores * GP),
    )(xg, w1_blk)

    m1, v1 = finalize(sum1, sq1)
    sc1, sh1 = affine(m1, v1, g1, b1)
    w1f_blk = blk(w1t.astype(F32) * sc1[None, :])                   # scale folded
    sh1_t = jnp.tile(sh1, G).reshape(1, GP)

    # -------------------- pass 2: stats of conv2 output --------------------
    sum2, sq2 = pl.pallas_call(
        _stats2_kernel,
        grid=(num_cores, tiles_per_core),
        in_specs=[stream_spec2(GK), resident2((GK, GP)),
                  resident2((GP, GP)), resident2((1, GP))],
        out_specs=stats_out_specs,
        out_shape=stats_out_shape,
        compiler_params=pltpu.CompilerParams(
            dimension_semantics=stats_sem, vmem_limit_bytes=vmem_limit),
        cost_estimate=pl.CostEstimate(
            flops=2 * MG * GP * (GK + GP) + 6 * MG * GP,
            transcendentals=0,
            bytes_accessed=2 * MG * GK + 2 * (GK * GP + GP * GP) + 4 * GP
            + 4 * 2 * 8 * num_cores * GP),
    )(xg, w1f_blk, w2_blk, sh1_t)

    # Analytic padded-row correction: every zero-padded row produces exactly
    # y2_pad = relu(sh1) @ w2 (computed here with the same bf16 operands the
    # kernel used), so subtract its contribution from the raw sums.
    y1_pad = jnp.maximum(sh1, 0.0).astype(BF16)[None, :]
    y2_pad = jnp.dot(y1_pad, w2t.astype(BF16),
                     preferred_element_type=F32)[0]
    m2, v2 = finalize(sum2, sq2,
                      n_pad * y2_pad, n_pad * y2_pad * y2_pad)
    sc2, sh2 = affine(m2, v2, g2, b2)
    w2f_blk = blk(w2t.astype(F32) * sc2[None, :])                   # scale folded
    sh2_t = jnp.tile(sh2, G).reshape(1, GP)

    # ---------- pass 3: forward + residual + ReLU, lane-dense store ----------
    outg = pl.pallas_call(
        _final_kernel,
        grid=(num_tiles,),
        in_specs=[stream_spec1(GK), resident1((GK, GP)), resident1((GP, GP)),
                  resident1((GK, GP)), resident1((1, GP)), resident1((1, GP))],
        out_specs=stream_spec1(GP),
        out_shape=jax.ShapeDtypeStruct((MG, GP), F32),
        compiler_params=pltpu.CompilerParams(
            dimension_semantics=("parallel",),   # shards across TCs on v7x
            vmem_limit_bytes=vmem_limit),
        cost_estimate=pl.CostEstimate(
            flops=2 * MG * GP * (2 * GK + GP) + 5 * MG * GP,
            transcendentals=0,
            bytes_accessed=2 * MG * GK + 4 * MG * GP
            + 2 * (2 * GK * GP + GP * GP) + 4 * 2 * GP),
    )(xg, w1f_blk, w2f_blk, s_blk, sh1_t, sh2_t)

    # Boundary relayout back to the module's NCHW layout (fused slice+reshape).
    out = outg.reshape(M_pad, P)[:M]
    return out.reshape(N, 1, H, P)


def basic_block_reference(x_nchw, w1t, w2t, g1, b1, g2, b2,
                          *, kernel_size: int, planes: int):
    """Pure-JAX reference mirroring PyTorch BasicBlock.forward (train-mode BN)."""
    N, _, H, _ = x_nchw.shape
    hi = jax.lax.Precision.HIGHEST
    a = x_nchw.reshape(N * H, kernel_size).astype(jnp.float32)
    y1 = jnp.dot(a, w1t, precision=hi)
    m1 = y1.mean(0); v1 = ((y1 - m1) ** 2).mean(0)
    y1 = (y1 - m1) / jnp.sqrt(v1 + EPS) * g1 + b1
    y1 = jnp.maximum(y1, 0.0)
    y2 = jnp.dot(y1, w2t, precision=hi)
    m2 = y2.mean(0); v2 = ((y2 - m2) ** 2).mean(0)
    y2 = (y2 - m2) / jnp.sqrt(v2 + EPS) * g2 + b2
    ident = jnp.concatenate([a, a], axis=1) if kernel_size != planes else a
    out = jnp.maximum(y2 + ident, 0.0)
    return out.reshape(N, 1, H, planes)


if __name__ == "__main__":
    # Small shapes consistent with the module: x is NCHW with C=1, W=kernel_size.
    N, H = 2, 16
    kernel_size, planes = 8, 16          # exercises the 2*K == P concat-identity path

    key = jax.random.PRNGKey(0)
    kx, k1, k2 = jax.random.split(key, 3)

    x = jax.random.normal(kx, (N, 1, H, kernel_size), dtype=jnp.float32)
    # conv1 weight: torch shape (planes, 1, 1, kernel_size) -> matmul form (K, P)
    w1t = 0.1 * jax.random.normal(k1, (kernel_size, planes), dtype=jnp.float32)
    # conv2 weight: torch shape (planes, 1, 1, planes)      -> matmul form (P, P)
    w2t = 0.1 * jax.random.normal(k2, (planes, planes), dtype=jnp.float32)
    # BatchNorm2d default init: gamma=1, beta=0 (running stats unused in train mode)
    g1 = jnp.ones((planes,), jnp.float32); b1 = jnp.zeros((planes,), jnp.float32)
    g2 = jnp.ones((planes,), jnp.float32); b2 = jnp.zeros((planes,), jnp.float32)

    fwd = jax.jit(functools.partial(basic_block_forward,
                                    kernel_size=kernel_size, planes=planes))
    out = fwd(x, w1t, w2t, g1, b1, g2, b2)
    out = jax.block_until_ready(out)

    ref = basic_block_reference(x, w1t, w2t, g1, b1, g2, b2,
                                kernel_size=kernel_size, planes=planes)
    assert out.shape == (N, 1, H, planes)
    # bf16 MXU operands (per perf review) -> compare at bf16-appropriate tolerance
    # against the f32 HIGHEST-precision reference.
    max_err = float(jnp.max(jnp.abs(out - ref)))
    assert jnp.allclose(out, ref, atol=4e-2, rtol=4e-2), f"mismatch vs ref: {max_err}"

    print("KERNEL_OK")
</pallas_src>

<mosaic_0001>
module attributes {stable_mosaic.version = 11 : i64} {
  func.func @_stats1_kernel(%arg0: i32, %arg1: i32, %arg2: memref<16x128xbf16, #tpu.memory_space<vmem>>, %arg3: memref<128x256xbf16, #tpu.memory_space<vmem>>, %arg4: memref<8x256xf32, #tpu.memory_space<vmem>>, %arg5: memref<8x256xf32, #tpu.memory_space<vmem>>) attributes {dimension_semantics = [#tpu.dimension_semantics<parallel>, #tpu.dimension_semantics<arbitrary>], iteration_bounds = array<i64: 1, 1>, scalar_prefetch = 0 : i64, scratch_operands = 0 : i64, tpu.core_type = #tpu.core_type<tc>, window_params = [{transform_indices = @transform_0, window_bounds = array<i64: 16, 128>}, {pipeline_mode = #tpu.pipeline_mode<synchronous>, transform_indices = @transform_1, window_bounds = array<i64: 128, 256>}, {transform_indices = @transform_2, window_bounds = array<i64: 8, 256>}, {transform_indices = @transform_3, window_bounds = array<i64: 8, 256>}]} {
    %c0_i32 = arith.constant 0 : i32
    %0 = arith.cmpi eq, %arg1, %c0_i32 : i32
    %1 = arith.extui %0 : i1 to i32
    %c0_i32_0 = arith.constant 0 : i32
    %2 = arith.cmpi ne, %1, %c0_i32_0 : i32
    scf.if %2 {
      %cst_14 = arith.constant 0.000000e+00 : f32
      %17 = vector.broadcast %cst_14 : f32 to vector<8x256xf32>
      %c0_15 = arith.constant 0 : index
      %c0_16 = arith.constant 0 : index
      %18 = vector.load %arg4[%c0_15, %c0_16] : memref<8x256xf32, #tpu.memory_space<vmem>>, vector<8x256xf32>
      tpu.vector_store %arg4[%c0_15, %c0_16], %17 {strides = array<i32>} : memref<8x256xf32, #tpu.memory_space<vmem>>, vector<8x256xf32>,
      %cst_17 = arith.constant 0.000000e+00 : f32
      %19 = vector.broadcast %cst_17 : f32 to vector<8x256xf32>
      %c0_18 = arith.constant 0 : index
      %c0_19 = arith.constant 0 : index
      %20 = vector.load %arg5[%c0_18, %c0_19] : memref<8x256xf32, #tpu.memory_space<vmem>>, vector<8x256xf32>
      tpu.vector_store %arg5[%c0_18, %c0_19], %19 {strides = array<i32>} : memref<8x256xf32, #tpu.memory_space<vmem>>, vector<8x256xf32>,
    } else {
    }
    %c0 = arith.constant 0 : index
    %c0_1 = arith.constant 0 : index
    %3 = vector.load %arg2[%c0, %c0_1] : memref<16x128xbf16, #tpu.memory_space<vmem>>, vector<16x128xbf16>
    %c0_2 = arith.constant 0 : index
    %c0_3 = arith.constant 0 : index
    %4 = vector.load %arg3[%c0_2, %c0_3] : memref<128x256xbf16, #tpu.memory_space<vmem>>, vector<128x256xbf16>
    %cst = arith.constant dense<0.000000e+00> : vector<16x256xf32>
    %5 = tpu.matmul %3, %4, %cst {dimension_numbers = #tpu.dot_dimension_numbers<[1], [0], [0], [1], [0, 0, 1, 1], [], []>} : vector<16x128xbf16>, vector<128x256xbf16>, vector<16x256xf32> -> vector<16x256xf32>
    %c0_4 = arith.constant 0 : index
    %c0_5 = arith.constant 0 : index
    %6 = vector.load %arg4[%c0_4, %c0_5] : memref<8x256xf32, #tpu.memory_space<vmem>>, vector<1x256xf32>
    %cst_6 = arith.constant dense<0.000000e+00> : vector<256xf32>
    %7 = vector.multi_reduction <add>, %5, %cst_6 [0] : vector<16x256xf32> to vector<256xf32>
    %8 = vector.shape_cast %7 : vector<256xf32> to vector<1x256xf32>
    %9 = arith.addf %6, %8 : vector<1x256xf32>
    %c0_7 = arith.constant 0 : index
    %c0_8 = arith.constant 0 : index
    %10 = vector.load %arg4[%c0_7, %c0_8] : memref<8x256xf32, #tpu.memory_space<vmem>>, vector<1x256xf32>
    tpu.vector_store %arg4[%c0_7, %c0_8], %9 {strides = array<i32>} : memref<8x256xf32, #tpu.memory_space<vmem>>, vector<1x256xf32>,
    %c0_9 = arith.constant 0 : index
    %c0_10 = arith.constant 0 : index
    %11 = vector.load %arg5[%c0_9, %c0_10] : memref<8x256xf32, #tpu.memory_space<vmem>>, vector<1x256xf32>
    %12 = arith.mulf %5, %5 : vector<16x256xf32>
    %cst_11 = arith.constant dense<0.000000e+00> : vector<256xf32>
    %13 = vector.multi_reduction <add>, %12, %cst_11 [0] : vector<16x256xf32> to vector<256xf32>
    %14 = vector.shape_cast %13 : vector<256xf32> to vector<1x256xf32>
    %15 = arith.addf %11, %14 : vector<1x256xf32>
    %c0_12 = arith.constant 0 : index
    %c0_13 = arith.constant 0 : index
    %16 = vector.load %arg5[%c0_12, %c0_13] : memref<8x256xf32, #tpu.memory_space<vmem>>, vector<1x256xf32>
    tpu.vector_store %arg5[%c0_12, %c0_13], %15 {strides = array<i32>} : memref<8x256xf32, #tpu.memory_space<vmem>>, vector<1x256xf32>,
    return
  }
  func.func @transform_0(%arg0: i32, %arg1: i32) -> (i32, i32) {
    %c1_i32 = arith.constant 1 : i32
    %0 = arith.muli %arg0, %c1_i32 : i32
    %1 = arith.addi %0, %arg1 : i32
    %c0_i32 = arith.constant 0 : i32
    %c0_i32_0 = arith.constant 0 : i32
    return %1, %c0_i32 : i32, i32
  }
  func.func @transform_1(%arg0: i32, %arg1: i32) -> (i32, i32) {
    %c0_i32 = arith.constant 0 : i32
    %c0_i32_0 = arith.constant 0 : i32
    %c0_i32_1 = arith.constant 0 : i32
    return %c0_i32, %c0_i32_0 : i32, i32
  }
  func.func @transform_2(%arg0: i32, %arg1: i32) -> (i32, i32) {
    %c0_i32 = arith.constant 0 : i32
    %c0_i32_0 = arith.constant 0 : i32
    return %arg0, %c0_i32 : i32, i32
  }
  func.func @transform_3(%arg0: i32, %arg1: i32) -> (i32, i32) {
    %c0_i32 = arith.constant 0 : i32
    %c0_i32_0 = arith.constant 0 : i32
    return %arg0, %c0_i32 : i32, i32
  }
}

module attributes {stable_mosaic.version = 11 : i64} {
  func.func @_stats2_kernel(%arg0: i32, %arg1: i32, %arg2: memref<16x128xbf16, #tpu.memory_space<vmem>>, %arg3: memref<128x256xbf16, #tpu.memory_space<vmem>>, %arg4: memref<256x256xbf16, #tpu.memory_space<vmem>>, %arg5: memref<1x256xf32, #tpu.memory_space<vmem>>, %arg6: memref<8x256xf32, #tpu.memory_space<vmem>>, %arg7: memref<8x256xf32, #tpu.memory_space<vmem>>) attributes {dimension_semantics = [#tpu.dimension_semantics<parallel>, #tpu.dimension_semantics<arbitrary>], iteration_bounds = array<i64: 1, 1>, scalar_prefetch = 0 : i64, scratch_operands = 0 : i64, tpu.core_type = #tpu.core_type<tc>, window_params = [{transform_indices = @transform_0, window_bounds = array<i64: 16, 128>}, {pipeline_mode = #tpu.pipeline_mode<synchronous>, transform_indices = @transform_1, window_bounds = array<i64: 128, 256>}, {pipeline_mode = #tpu.pipeline_mode<synchronous>, transform_indices = @transform_2, window_bounds = array<i64: 256, 256>}, {pipeline_mode = #tpu.pipeline_mode<synchronous>, transform_indices = @transform_3, window_bounds = array<i64: 1, 256>}, {transform_indices = @transform_4, window_bounds = array<i64: 8, 256>}, {transform_indices = @transform_5, window_bounds = array<i64: 8, 256>}]} {
    %c0_i32 = arith.constant 0 : i32
    %0 = arith.cmpi eq, %arg1, %c0_i32 : i32
    %1 = arith.extui %0 : i1 to i32
    %c0_i32_0 = arith.constant 0 : i32
    %2 = arith.cmpi ne, %1, %c0_i32_0 : i32
    scf.if %2 {
      %cst_20 = arith.constant 0.000000e+00 : f32
      %25 = vector.broadcast %cst_20 : f32 to vector<8x256xf32>
      %c0_21 = arith.constant 0 : index
      %c0_22 = arith.constant 0 : index
      %26 = vector.load %arg6[%c0_21, %c0_22] : memref<8x256xf32, #tpu.memory_space<vmem>>, vector<8x256xf32>
      tpu.vector_store %arg6[%c0_21, %c0_22], %25 {strides = array<i32>} : memref<8x256xf32, #tpu.memory_space<vmem>>, vector<8x256xf32>,
      %cst_23 = arith.constant 0.000000e+00 : f32
      %27 = vector.broadcast %cst_23 : f32 to vector<8x256xf32>
      %c0_24 = arith.constant 0 : index
      %c0_25 = arith.constant 0 : index
      %28 = vector.load %arg7[%c0_24, %c0_25] : memref<8x256xf32, #tpu.memory_space<vmem>>, vector<8x256xf32>
      tpu.vector_store %arg7[%c0_24, %c0_25], %27 {strides = array<i32>} : memref<8x256xf32, #tpu.memory_space<vmem>>, vector<8x256xf32>,
    } else {
    }
    %c0 = arith.constant 0 : index
    %c0_1 = arith.constant 0 : index
    %3 = vector.load %arg2[%c0, %c0_1] : memref<16x128xbf16, #tpu.memory_space<vmem>>, vector<16x128xbf16>
    %c0_2 = arith.constant 0 : index
    %c0_3 = arith.constant 0 : index
    %4 = vector.load %arg3[%c0_2, %c0_3] : memref<128x256xbf16, #tpu.memory_space<vmem>>, vector<128x256xbf16>
    %cst = arith.constant dense<0.000000e+00> : vector<16x256xf32>
    %5 = tpu.matmul %3, %4, %cst {dimension_numbers = #tpu.dot_dimension_numbers<[1], [0], [0], [1], [0, 0, 1, 1], [], []>} : vector<16x128xbf16>, vector<128x256xbf16>, vector<16x256xf32> -> vector<16x256xf32>
    %c0_4 = arith.constant 0 : index
    %c0_5 = arith.constant 0 : index
    %6 = vector.load %arg5[%c0_4, %c0_5] : memref<1x256xf32, #tpu.memory_space<vmem>>, vector<1x256xf32>
    %7 = vector.broadcast %6 : vector<1x256xf32> to vector<16x256xf32>
    %8 = arith.addf %5, %7 : vector<16x256xf32>
    %cst_6 = arith.constant 0.000000e+00 : f32
    %9 = vector.broadcast %cst_6 : f32 to vector<16x256xf32>
    %10 = arith.maximumf %8, %9 : vector<16x256xf32>
    %11 = arith.truncf %10 : vector<16x256xf32> to vector<16x256xbf16>
    %c0_7 = arith.constant 0 : index
    %c0_8 = arith.constant 0 : index
    %12 = vector.load %arg4[%c0_7, %c0_8] : memref<256x256xbf16, #tpu.memory_space<vmem>>, vector<256x256xbf16>
    %cst_9 = arith.constant dense<0.000000e+00> : vector<16x256xf32>
    %13 = tpu.matmul %11, %12, %cst_9 {dimension_numbers = #tpu.dot_dimension_numbers<[1], [0], [0], [1], [0, 0, 1, 1], [], []>} : vector<16x256xbf16>, vector<256x256xbf16>, vector<16x256xf32> -> vector<16x256xf32>
    %c0_10 = arith.constant 0 : index
    %c0_11 = arith.constant 0 : index
    %14 = vector.load %arg6[%c0_10, %c0_11] : memref<8x256xf32, #tpu.memory_space<vmem>>, vector<1x256xf32>
    %cst_12 = arith.constant dense<0.000000e+00> : vector<256xf32>
    %15 = vector.multi_reduction <add>, %13, %cst_12 [0] : vector<16x256xf32> to vector<256xf32>
    %16 = vector.shape_cast %15 : vector<256xf32> to vector<1x256xf32>
    %17 = arith.addf %14, %16 : vector<1x256xf32>
    %c0_13 = arith.constant 0 : index
    %c0_14 = arith.constant 0 : index
    %18 = vector.load %arg6[%c0_13, %c0_14] : memref<8x256xf32, #tpu.memory_space<vmem>>, vector<1x256xf32>
    tpu.vector_store %arg6[%c0_13, %c0_14], %17 {strides = array<i32>} : memref<8x256xf32, #tpu.memory_space<vmem>>, vector<1x256xf32>,
    %c0_15 = arith.constant 0 : index
    %c0_16 = arith.constant 0 : index
    %19 = vector.load %arg7[%c0_15, %c0_16] : memref<8x256xf32, #tpu.memory_space<vmem>>, vector<1x256xf32>
    %20 = arith.mulf %13, %13 : vector<16x256xf32>
    %cst_17 = arith.constant dense<0.000000e+00> : vector<256xf32>
    %21 = vector.multi_reduction <add>, %20, %cst_17 [0] : vector<16x256xf32> to vector<256xf32>
    %22 = vector.shape_cast %21 : vector<256xf32> to vector<1x256xf32>
    %23 = arith.addf %19, %22 : vector<1x256xf32>
    %c0_18 = arith.constant 0 : index
    %c0_19 = arith.constant 0 : index
    %24 = vector.load %arg7[%c0_18, %c0_19] : memref<8x256xf32, #tpu.memory_space<vmem>>, vector<1x256xf32>
    tpu.vector_store %arg7[%c0_18, %c0_19], %23 {strides = array<i32>} : memref<8x256xf32, #tpu.memory_space<vmem>>, vector<1x256xf32>,
    return
  }
  func.func @transform_0(%arg0: i32, %arg1: i32) -> (i32, i32) {
    %c1_i32 = arith.constant 1 : i32
    %0 = arith.muli %arg0, %c1_i32 : i32
    %1 = arith.addi %0, %arg1 : i32
    %c0_i32 = arith.constant 0 : i32
    %c0_i32_0 = arith.constant 0 : i32
    return %1, %c0_i32 : i32, i32
  }
  func.func @transform_1(%arg0: i32, %arg1: i32) -> (i32, i32) {
    %c0_i32 = arith.constant 0 : i32
    %c0_i32_0 = arith.constant 0 : i32
    %c0_i32_1 = arith.constant 0 : i32
    return %c0_i32, %c0_i32_0 : i32, i32
  }
  func.func @transform_2(%arg0: i32, %arg1: i32) -> (i32, i32) {
    %c0_i32 = arith.constant 0 : i32
    %c0_i32_0 = arith.constant 0 : i32
    %c0_i32_1 = arith.constant 0 : i32
    return %c0_i32, %c0_i32_0 : i32, i32
  }
  func.func @transform_3(%arg0: i32, %arg1: i32) -> (i32, i32) {
    %c0_i32 = arith.constant 0 : i32
    %c0_i32_0 = arith.constant 0 : i32
    %c0_i32_1 = arith.constant 0 : i32
    return %c0_i32, %c0_i32_0 : i32, i32
  }
  func.func @transform_4(%arg0: i32, %arg1: i32) -> (i32, i32) {
    %c0_i32 = arith.constant 0 : i32
    %c0_i32_0 = arith.constant 0 : i32
    return %arg0, %c0_i32 : i32, i32
  }
  func.func @transform_5(%arg0: i32, %arg1: i32) -> (i32, i32) {
    %c0_i32 = arith.constant 0 : i32
    %c0_i32_0 = arith.constant 0 : i32
    return %arg0, %c0_i32 : i32, i32
  }
}

module attributes {stable_mosaic.version = 11 : i64} {
  func.func @_final_kernel(%arg0: i32, %arg1: memref<16x128xbf16, #tpu.memory_space<vmem>>, %arg2: memref<128x256xbf16, #tpu.memory_space<vmem>>, %arg3: memref<256x256xbf16, #tpu.memory_space<vmem>>, %arg4: memref<128x256xbf16, #tpu.memory_space<vmem>>, %arg5: memref<1x256xf32, #tpu.memory_space<vmem>>, %arg6: memref<1x256xf32, #tpu.memory_space<vmem>>, %arg7: memref<16x256xf32, #tpu.memory_space<vmem>>) attributes {dimension_semantics = [#tpu.dimension_semantics<parallel>], iteration_bounds = array<i64: 1>, scalar_prefetch = 0 : i64, scratch_operands = 0 : i64, tpu.core_type = #tpu.core_type<tc>, window_params = [{transform_indices = @transform_0, window_bounds = array<i64: 16, 128>}, {pipeline_mode = #tpu.pipeline_mode<synchronous>, transform_indices = @transform_1, window_bounds = array<i64: 128, 256>}, {pipeline_mode = #tpu.pipeline_mode<synchronous>, transform_indices = @transform_2, window_bounds = array<i64: 256, 256>}, {pipeline_mode = #tpu.pipeline_mode<synchronous>, transform_indices = @transform_3, window_bounds = array<i64: 128, 256>}, {pipeline_mode = #tpu.pipeline_mode<synchronous>, transform_indices = @transform_4, window_bounds = array<i64: 1, 256>}, {pipeline_mode = #tpu.pipeline_mode<synchronous>, transform_indices = @transform_5, window_bounds = array<i64: 1, 256>}, {transform_indices = @transform_6, window_bounds = array<i64: 16, 256>}]} {
    %c0 = arith.constant 0 : index
    %c0_0 = arith.constant 0 : index
    %0 = vector.load %arg1[%c0, %c0_0] : memref<16x128xbf16, #tpu.memory_space<vmem>>, vector<16x128xbf16>
    %c0_1 = arith.constant 0 : index
    %c0_2 = arith.constant 0 : index
    %1 = vector.load %arg2[%c0_1, %c0_2] : memref<128x256xbf16, #tpu.memory_space<vmem>>, vector<128x256xbf16>
    %cst = arith.constant dense<0.000000e+00> : vector<16x256xf32>
    %2 = tpu.matmul %0, %1, %cst {dimension_numbers = #tpu.dot_dimension_numbers<[1], [0], [0], [1], [0, 0, 1, 1], [], []>} : vector<16x128xbf16>, vector<128x256xbf16>, vector<16x256xf32> -> vector<16x256xf32>
    %c0_3 = arith.constant 0 : index
    %c0_4 = arith.constant 0 : index
    %3 = vector.load %arg5[%c0_3, %c0_4] : memref<1x256xf32, #tpu.memory_space<vmem>>, vector<1x256xf32>
    %4 = vector.broadcast %3 : vector<1x256xf32> to vector<16x256xf32>
    %5 = arith.addf %2, %4 : vector<16x256xf32>
    %cst_5 = arith.constant 0.000000e+00 : f32
    %6 = vector.broadcast %cst_5 : f32 to vector<16x256xf32>
    %7 = arith.maximumf %5, %6 : vector<16x256xf32>
    %8 = arith.truncf %7 : vector<16x256xf32> to vector<16x256xbf16>
    %c0_6 = arith.constant 0 : index
    %c0_7 = arith.constant 0 : index
    %9 = vector.load %arg3[%c0_6, %c0_7] : memref<256x256xbf16, #tpu.memory_space<vmem>>, vector<256x256xbf16>
    %cst_8 = arith.constant dense<0.000000e+00> : vector<16x256xf32>
    %10 = tpu.matmul %8, %9, %cst_8 {dimension_numbers = #tpu.dot_dimension_numbers<[1], [0], [0], [1], [0, 0, 1, 1], [], []>} : vector<16x256xbf16>, vector<256x256xbf16>, vector<16x256xf32> -> vector<16x256xf32>
    %c0_9 = arith.constant 0 : index
    %c0_10 = arith.constant 0 : index
    %11 = vector.load %arg6[%c0_9, %c0_10] : memref<1x256xf32, #tpu.memory_space<vmem>>, vector<1x256xf32>
    %12 = vector.broadcast %11 : vector<1x256xf32> to vector<16x256xf32>
    %13 = arith.addf %10, %12 : vector<16x256xf32>
    %c0_11 = arith.constant 0 : index
    %c0_12 = arith.constant 0 : index
    %14 = vector.load %arg4[%c0_11, %c0_12] : memref<128x256xbf16, #tpu.memory_space<vmem>>, vector<128x256xbf16>
    %cst_13 = arith.constant dense<0.000000e+00> : vector<16x256xf32>
    %15 = tpu.matmul %0, %14, %cst_13 {dimension_numbers = #tpu.dot_dimension_numbers<[1], [0], [0], [1], [0, 0, 1, 1], [], []>} : vector<16x128xbf16>, vector<128x256xbf16>, vector<16x256xf32> -> vector<16x256xf32>
    %16 = arith.addf %13, %15 : vector<16x256xf32>
    %cst_14 = arith.constant 0.000000e+00 : f32
    %17 = vector.broadcast %cst_14 : f32 to vector<16x256xf32>
    %18 = arith.maximumf %16, %17 : vector<16x256xf32>
    %c0_15 = arith.constant 0 : index
    %c0_16 = arith.constant 0 : index
    %19 = vector.load %arg7[%c0_15, %c0_16] : memref<16x256xf32, #tpu.memory_space<vmem>>, vector<16x256xf32>
    tpu.vector_store %arg7[%c0_15, %c0_16], %18 {strides = array<i32>} : memref<16x256xf32, #tpu.memory_space<vmem>>, vector<16x256xf32>,
    return
  }
  func.func @transform_0(%arg0: i32) -> (i32, i32) {
    %c0_i32 = arith.constant 0 : i32
    %c0_i32_0 = arith.constant 0 : i32
    return %arg0, %c0_i32 : i32, i32
  }
  func.func @transform_1(%arg0: i32) -> (i32, i32) {
    %c0_i32 = arith.constant 0 : i32
    %c0_i32_0 = arith.constant 0 : i32
    %c0_i32_1 = arith.constant 0 : i32
    return %c0_i32, %c0_i32_0 : i32, i32
  }
  func.func @transform_2(%arg0: i32) -> (i32, i32) {
    %c0_i32 = arith.constant 0 : i32
    %c0_i32_0 = arith.constant 0 : i32
    %c0_i32_1 = arith.constant 0 : i32
    return %c0_i32, %c0_i32_0 : i32, i32
  }
  func.func @transform_3(%arg0: i32) -> (i32, i32) {
    %c0_i32 = arith.constant 0 : i32
    %c0_i32_0 = arith.constant 0 : i32
    %c0_i32_1 = arith.constant 0 : i32
    return %c0_i32, %c0_i32_0 : i32, i32
  }
  func.func @transform_4(%arg0: i32) -> (i32, i32) {
    %c0_i32 = arith.constant 0 : i32
    %c0_i32_0 = arith.constant 0 : i32
    %c0_i32_1 = arith.constant 0 : i32
    return %c0_i32, %c0_i32_0 : i32, i32
  }
  func.func @transform_5(%arg0: i32) -> (i32, i32) {
    %c0_i32 = arith.constant 0 : i32
    %c0_i32_0 = arith.constant 0 : i32
    %c0_i32_1 = arith.constant 0 : i32
    return %c0_i32, %c0_i32_0 : i32, i32
  }
  func.func @transform_6(%arg0: i32) -> (i32, i32) {
    %c0_i32 = arith.constant 0 : i32
    %c0_i32_0 = arith.constant 0 : i32
    return %arg0, %c0_i32 : i32, i32
  }
}

</mosaic_0001>

<llo_original>
// kernel: tile.13
$region0: #{tile.13}
  #allocation0 [shape = 's32[1]{0}', space=sflag, size = 0x4, scoped, tag = 'scoped memory for tile.13']
  %s0 = inlined_call_operand.vmem [shape: f32[16], index: 0, kind: input, shape index: {}]
  %s1 = inlined_call_operand.vmem [shape: f32[16,16], index: 1, kind: output, shape index: {}]
  // Predicated region
  $region2: #{tile.13} parent=0 // pred_check
    _
  $region3: #{tile.13} parent=0 // pred_check_branch
    %3 = sbr.rel (0) target = $region5
  $region4: #{tile.13} parent=0 // pred_region
    _
  $region5: #{tile.13} parent=0 // pred_fallthru
    _
  %v4 = vld [vmem:[%s0] ss:$0 sm:$0xff]
  %5 = vst [vmem:[%s1] sm:$0xff] %v4
  %s6 = scalar_lea.vmem %s1, 8
  %7 = vst [vmem:[%s6] sm:$0xff] %v4

// kernel: tile.14
$region0: #{tile.14}
  %s0 = inlined_call_operand.vmem [shape: f32[16,16], index: 0, kind: input, shape index: {}]
  %s1 = inlined_call_operand.vmem [shape: f32[1,256], index: 1, kind: output, shape index: {}]
  $region1: #{tile.14} parent=0
    #allocation0 [shape = 'u8[8192]{0}', space=vmem, size = 0x2000, scoped, tag = 'scoped mem for output reshape']
    %s2 = smov 3
    %v3 = vld [vmem:[%s0] ss:$8 sm:%s2]
    %vm4 = vcmask 130048
    %5 = vst.msk [vmem:[#allocation0] ss:$8 sm:$0x3] %vm4, %v3
    %s6 = scalar_lea.vmem %s0, 7
    %s7 = smov 3
    %v8 = vld [vmem:[%s6] ss:$8 sm:%s7]
    %9 = vrot.lane.b32.xlu0 %v8, 112
    %v10 = vpop.permute.xlu0 %9
    %vm11 = vcmask 1048448
    %12 = vst.msk [vmem:[#allocation0] ss:$8 sm:$0x3] %vm11, %v10
    %s13 = scalar_lea.vmem %s0, 6
    %s14 = smov 3
    %v15 = vld [vmem:[%s13] ss:$8 sm:%s14]
    %16 = vrot.lane.b32.xlu0 %v15, 96
    %v17 = vpop.permute.xlu0 %16
    %vm18 = vcmask 917248
    %19 = vst.msk [vmem:[#allocation0] ss:$8 sm:$0x3] %vm18, %v17
    %s20 = scalar_lea.vmem %s0, 5
    %s21 = smov 3
    %v22 = vld [vmem:[%s20] ss:$8 sm:%s21]
    %23 = vrot.lane.b32.xlu0 %v22, 80
    %v24 = vpop.permute.xlu0 %23
    %vm25 = vcmask 786048
    %26 = vst.msk [vmem:[#allocation0] ss:$8 sm:$0x3] %vm25, %v24
    %s27 = scalar_lea.vmem %s0, 4
    %s28 = smov 3
    %v29 = vld [vmem:[%s27] ss:$8 sm:%s28]
    %30 = vrot.lane.b32.xlu0 %v29, 64
    %v31 = vpop.permute.xlu0 %30
    %vm32 = vcmask 654848
    %33 = vst.msk [vmem:[#allocation0] ss:$8 sm:$0x3] %vm32, %v31
    %s34 = scalar_lea.vmem %s0, 3
    %s35 = smov 3
    %v36 = vld [vmem:[%s34] ss:$8 sm:%s35]
    %37 = vrot.lane.b32.xlu0 %v36, 48
    %v38 = vpop.permute.xlu0 %37
    %vm39 = vcmask 523648
    %40 = vst.msk [vmem:[#allocation0] ss:$8 sm:$0x3] %vm39, %v38
    %s41 = scalar_lea.vmem %s0, 2
    %s42 = smov 3
    %v43 = vld [vmem:[%s41] ss:$8 sm:%s42]
    %44 = vrot.lane.b32.xlu0 %v43, 32
    %v45 = vpop.permute.xlu0 %44
    %vm46 = vcmask 392448
    %47 = vst.msk [vmem:[#allocation0] ss:$8 sm:$0x3] %vm46, %v45
    %s48 = scalar_lea.vmem %s0, 1
    %s49 = smov 3
    %v50 = vld [vmem:[%s48] ss:$8 sm:%s49]
    %51 = vrot.lane.b32.xlu0 %v50, 16
    %v52 = vpop.permute.xlu0 %51
    %vm53 = vcmask 261248
    %54 = vst.msk [vmem:[#allocation0] ss:$8 sm:$0x3] %vm53, %v52
    %s56 = ssub.s32 2, 1
    %v57 = vld [vmem:[#allocation0] sm:%s56]
    %s59 = ssub.s32 2, 1
    %60 = vst [vmem:[%s1] sm:%s59] %v57
    %s61 = scalar_lea.vmem [#allocation0], 8
    %v62 = vld [vmem:[%s61] sm:%s56]
    %s64 = ssub.s32 2, 1
    %s65 = scalar_lea.vmem %s1, 1
    %66 = vst [vmem:[%s65] sm:%s64] %v62

// kernel: basic_block_forward.3
$region0: #{basic_block_forward.3}
  #allocation0 [shape = 'u32[]', space=smem, size = 0x4, offset = 0x4, fixed_abs, tag = 'smem constant byte address 0x4 - core index']
  #allocation1 [shape = 'u32[72,128]{1,0:T(1,128)}', space=vmem, size = 0x9000, scoped, tag = 'internal scratch']
  %s0 = inlined_call_operand.vmem [shape: bf16[16,128], index: 0, kind: input, shape index: {}]
  %s1 = inlined_call_operand.vmem [shape: bf16[128,256], index: 1, kind: input, shape index: {}]
  %s2 = inlined_call_operand.vmem [shape: f32[8,256], index: 2, kind: output, shape index: {0}]
  %s3 = inlined_call_operand.vmem [shape: f32[8,256], index: 3, kind: output, shape index: {1}]
  %4 = xla_tuple %s2, %s3
  %s5 = sld [smem:[#allocation0]]
  $region30: #{basic_block_forward.3} parent=0
    _
  %s7 = ssub.s32 1, %s5
  %s8 = scalar_select 0, %s7, %s5
  // Predicated region
  $region2: #{basic_block_forward.3} parent=0 // pred_check
    _
  $region3: #{basic_block_forward.3} parent=0 // pred_check_branch
    %10 = sbr.rel (0) target = $region5
  $region4: #{basic_block_forward.3} parent=0 // pred_region
    %s11 = sadd.s32 0, 0
    %s12 = smul.u32 2, %s11
    %p13 = scmp.lt.s32.totalorder %s12, 1
    %s14 = scalar_select %p13, %s12, 1
    %s15 = smul.addr %s14, 4
    %s16 = scalar_lea.vmem %s0, %s15
    %s17 = sadd.s32 0, 0
    %s18 = smul.u32 2, %s17
  $region5: #{basic_block_forward.3} parent=0 // pred_fallthru
    _
  // Predicated region
  $region6: #{basic_block_forward.3} parent=0 // pred_check
    _
  $region7: #{basic_block_forward.3} parent=0 // pred_check_branch
    %20 = sbr.rel (0) target = $region9
  $region8: #{basic_block_forward.3} parent=0 // pred_region
    _
  $region9: #{basic_block_forward.3} parent=0 // pred_fallthru
    _
  %s21 = sadd.s32 0, 0
  %s22 = smul.u32 2, %s21
  %p23 = scmp.lt.s32.totalorder %s22, 1
  %s24 = scalar_select %p23, %s22, 1
  %s25 = smul.addr %s24, 4
  %s26 = scalar_lea.vmem %s0, %s25
  %s27 = sadd.s32 0, 0
  %s28 = smul.u32 2, %s27
  %p29 = scmp.lt.s32.totalorder %s28, 1
  %s30 = scalar_select %p29, %s28, 1
  %s31 = smul.addr %s30, 4
  %s32 = scalar_lea.vmem %s0, %s31
  %s33 = sadd.s32 0, 0
  %s34 = smul.u32 2, %s33
  %p35 = scmp.eq.s32.totalorder 0, 0
  // Predicated region
  $region10: #{basic_block_forward.3} parent=0 // pred_check
    %p36 = pneg %p35
  $region11: #{basic_block_forward.3} parent=0 // pred_check_branch
    %38 = sbr.rel (%p36) target = $region13
  $region12: #{basic_block_forward.3} parent=0 // pred_region
    %39 = vst [vmem:[%s2] sm:$0xff] 0.0
    %40 = vst [vmem:[%s2 + $0x8] sm:$0xff] 0.0
    %41 = vst [vmem:[%s3] sm:$0xff] 0.0
    %42 = vst [vmem:[%s3 + $0x8] sm:$0xff] 0.0
  $region13: #{basic_block_forward.3} parent=0 // pred_fallthru
    _
  %v43 = vld [vmem:[%s32] sm:$0xf]
  %v44 = vld [vmem:[%s32 + $0x4] sm:$0xf]
  %v45 = vld [vmem:[%s1] sm:$0xff]
  %v46 = vld [vmem:[%s1 + $0x8] sm:$0xff]
  %v47 = vld [vmem:[%s1 + $0x10] sm:$0xff]
  %v48 = vld [vmem:[%s1 + $0x18] sm:$0xff]
  %v49 = vld [vmem:[%s1 + $0x20] sm:$0xff]
  %v50 = vld [vmem:[%s1 + $0x28] sm:$0xff]
  %v51 = vld [vmem:[%s1 + $0x30] sm:$0xff]
  %v52 = vld [vmem:[%s1 + $0x38] sm:$0xff]
  %v53 = vld [vmem:[%s1 + $0x40] sm:$0xff]
  %v54 = vld [vmem:[%s1 + $0x48] sm:$0xff]
  %v55 = vld [vmem:[%s1 + $0x50] sm:$0xff]
  %v56 = vld [vmem:[%s1 + $0x58] sm:$0xff]
  %v57 = vld [vmem:[%s1 + $0x60] sm:$0xff]
  %v58 = vld [vmem:[%s1 + $0x68] sm:$0xff]
  %v59 = vld [vmem:[%s1 + $0x70] sm:$0xff]
  %v60 = vld [vmem:[%s1 + $0x78] sm:$0xff]
  %v63 = vunpack.c.l.b16 %v43
  %v64 = vunpack.c.l.b16 %v44
  %v65 = vpack.c.b16 %v64, %v63
  %v83 = vunpack.c.l.b16 %v45
  %v84 = vunpack.c.h.b16 %v45
  %v85 = vunpack.c.l.b16 %v46
  %v86 = vunpack.c.h.b16 %v46
  %v87 = vunpack.c.l.b16 %v47
  %v88 = vunpack.c.h.b16 %v47
  %v89 = vunpack.c.l.b16 %v48
  %v90 = vunpack.c.h.b16 %v48
  %v91 = vunpack.c.l.b16 %v49
  %v92 = vunpack.c.h.b16 %v49
  %v93 = vunpack.c.l.b16 %v50
  %v94 = vunpack.c.h.b16 %v50
  %v95 = vunpack.c.l.b16 %v51
  %v96 = vunpack.c.h.b16 %v51
  %v97 = vunpack.c.l.b16 %v52
  %v98 = vunpack.c.h.b16 %v52
  %v99 = vunpack.c.l.b16 %v53
  %v100 = vunpack.c.h.b16 %v53
  %v101 = vunpack.c.l.b16 %v54
  %v102 = vunpack.c.h.b16 %v54
  %v103 = vunpack.c.l.b16 %v55
  %v104 = vunpack.c.h.b16 %v55
  %v105 = vunpack.c.l.b16 %v56
  %v106 = vunpack.c.h.b16 %v56
  %v107 = vunpack.c.l.b16 %v57
  %v108 = vunpack.c.h.b16 %v57
  %v109 = vunpack.c.l.b16 %v58
  %v110 = vunpack.c.h.b16 %v58
  %v111 = vunpack.c.l.b16 %v59
  %v112 = vunpack.c.h.b16 %v59
  %v113 = vunpack.c.l.b16 %v60
  %v114 = vunpack.c.h.b16 %v60
  %v115 = vpack.c.b16 %v85, %v83
  %v116 = vpack.c.b16 %v86, %v84
  %v117 = vpack.c.b16 %v89, %v87
  %v118 = vpack.c.b16 %v90, %v88
  %v119 = vpack.c.b16 %v93, %v91
  %v120 = vpack.c.b16 %v94, %v92
  %v121 = vpack.c.b16 %v97, %v95
  %v122 = vpack.c.b16 %v98, %v96
  %v123 = vpack.c.b16 %v101, %v99
  %v124 = vpack.c.b16 %v102, %v100
  %v125 = vpack.c.b16 %v105, %v103
  %v126 = vpack.c.b16 %v106, %v104
  %v127 = vpack.c.b16 %v109, %v107
  %v128 = vpack.c.b16 %v110, %v108
  %v129 = vpack.c.b16 %v113, %v111
  %v130 = vpack.c.b16 %v114, %v112
  %147 = vmatpush.bf16.msra.mxu0 %v129
  %148 = vmatpush.bf16.msra.mxu0 %v127
  %149 = vmatpush.bf16.msra.mxu0 %v125
  %150 = vmatpush.bf16.msra.mxu0 %v123
  %151 = vmatpush.bf16.msra.mxu0 %v121
  %152 = vmatpush.bf16.msra.mxu0 %v119
  %153 = vmatpush.bf16.msra.mxu0 %v117
  %154 = vmatpush.bf16.msra.mxu0 %v115
  %155 = vmatmul.bf16.gmra.mxu0 %v65
  %v156 = vpop.f32.mrf.mxu0
  %v157 = vadd.f32 0.0, %v156
  %v158 = vpop.f32.mrf.mxu0
  %v159 = vadd.f32 0.0, %v158
  %160 = vdwg.mxu0
  %161 = vmatpush.bf16.msra.mxu0 %v130
  %162 = vmatpush.bf16.msra.mxu0 %v128
  %163 = vmatpush.bf16.msra.mxu0 %v126
  %164 = vmatpush.bf16.msra.mxu0 %v124
  %165 = vmatpush.bf16.msra.mxu0 %v122
  %166 = vmatpush.bf16.msra.mxu0 %v120
  %167 = vmatpush.bf16.msra.mxu0 %v118
  %168 = vmatpush.bf16.msra.mxu0 %v116
  %169 = vmatmul.bf16.gmra.mxu0 %v65
  %v170 = vpop.f32.mrf.mxu0
  %v171 = vadd.f32 0.0, %v170
  %v172 = vpop.f32.mrf.mxu0
  %v173 = vadd.f32 0.0, %v172
  %174 = vdwg.mxu0
  %v175 = vld [vmem:[%s2] ss:$8 sm:$0x3]
  %v176 = vadd.f32 %v157, %v159
  %v177 = vrot.slane %v176, 4
  %v178 = vadd.f32 %v176, %v177
  %v179 = vrot.slane %v178, 2
  %v180 = vadd.f32 %v178, %v179
  %v181 = vrot.slane %v180, 1
  %v182 = vadd.f32 %v180, %v181
  %v183 = vadd.f32 %v171, %v173
  %v184 = vrot.slane %v183, 4
  %v185 = vadd.f32 %v183, %v184
  %v186 = vrot.slane %v185, 2
  %v187 = vadd.f32 %v185, %v186
  %v188 = vrot.slane %v187, 1
  %v189 = vadd.f32 %v187, %v188
  %v192 = vrot.slane %v189, 7
  %vm193 = vcmask 1040384
  %v194 = vsel %vm193, %v182, %v192
  %v196 = vadd.f32 %v175, %v194
  %v197 = vlaneseq
  %vm198 = vcmp.ge.s32.totalorder %v197, 0
  %vm199 = vcmp.lt.s32.totalorder %v197, 256
  %vm200 = vmand %vm198, %vm199
  %201 = vst.msk [vmem:[%s2] ss:$8 sm:$0x3] %vm200, %v196
  %202 = vst.msk [vmem:[%s2] ss:$8 sm:$0x0] %vm200, %v196
  %v203 = vld [vmem:[%s3] ss:$8 sm:$0x3]
  %v204 = vmul.f32 %v157, %v157
  %v205 = vmul.f32 %v171, %v171
  %v206 = vmul.f32 %v159, %v159
  %v207 = vmul.f32 %v173, %v173
  %v208 = vadd.f32 %v204, %v206
  %v209 = vrot.slane %v208, 4
  %v210 = vadd.f32 %v208, %v209
  %v211 = vrot.slane %v210, 2
  %v212 = vadd.f32 %v210, %v211
  %v213 = vrot.slane %v212, 1
  %v214 = vadd.f32 %v212, %v213
  %v215 = vadd.f32 %v205, %v207
  %v216 = vrot.slane %v215, 4
  %v217 = vadd.f32 %v215, %v216
  %v218 = vrot.slane %v217, 2
  %v219 = vadd.f32 %v217, %v218
  %v220 = vrot.slane %v219, 1
  %v221 = vadd.f32 %v219, %v220
  %v224 = vrot.slane %v221, 7
  %v225 = vsel %vm193, %v214, %v224
  %v227 = vadd.f32 %v203, %v225
  %228 = vst.msk [vmem:[%s3] ss:$8 sm:$0x3] %vm200, %v227
  %229 = vst.msk [vmem:[%s3] ss:$8 sm:$0x0] %vm200, %v227
  // Predicated region
  $region14: #{basic_block_forward.3} parent=0 // pred_check
    _
  $region15: #{basic_block_forward.3} parent=0 // pred_check_branch
    %231 = sbr.rel (0) target = $region17
  $region16: #{basic_block_forward.3} parent=0 // pred_region
    _
  $region17: #{basic_block_forward.3} parent=0 // pred_fallthru
    _
  // Predicated region
  $region18: #{basic_block_forward.3} parent=0 // pred_check
    _
  $region19: #{basic_block_forward.3} parent=0 // pred_check_branch
    %233 = sbr.rel (0) target = $region21
  $region20: #{basic_block_forward.3} parent=0 // pred_region
    _
  $region21: #{basic_block_forward.3} parent=0 // pred_fallthru
    _
  // Predicated region
  $region22: #{basic_block_forward.3} parent=0 // pred_check
    _
  $region23: #{basic_block_forward.3} parent=0 // pred_check_branch
    %235 = sbr.rel (0) target = $region25
  $region24: #{basic_block_forward.3} parent=0 // pred_region
    _
  $region25: #{basic_block_forward.3} parent=0 // pred_fallthru
    _
  // Predicated region
  $region26: #{basic_block_forward.3} parent=0 // pred_check
    _
  $region27: #{basic_block_forward.3} parent=0 // pred_check_branch
    %237 = sbr.rel (0) target = $region29
  $region28: #{basic_block_forward.3} parent=0 // pred_region
    _
  $region29: #{basic_block_forward.3} parent=0 // pred_fallthru
    _

// kernel: basic_block_forward.4
$region0: #{basic_block_forward.4}
  #allocation0 [shape = 'u32[]', space=smem, size = 0x4, offset = 0x4, fixed_abs, tag = 'smem constant byte address 0x4 - core index']
  #allocation1 [shape = 'u32[72,128]{1,0:T(1,128)}', space=vmem, size = 0x9000, scoped, tag = 'internal scratch']
  %s0 = inlined_call_operand.vmem [shape: bf16[16,128], index: 0, kind: input, shape index: {}]
  %s1 = inlined_call_operand.vmem [shape: bf16[128,256], index: 1, kind: input, shape index: {}]
  %s2 = inlined_call_operand.vmem [shape: bf16[256,256], index: 2, kind: input, shape index: {}]
  %s3 = inlined_call_operand.vmem [shape: f32[1,256], index: 3, kind: input, shape index: {}]
  %s4 = inlined_call_operand.vmem [shape: f32[8,256], index: 4, kind: output, shape index: {0}]
  %s5 = inlined_call_operand.vmem [shape: f32[8,256], index: 5, kind: output, shape index: {1}]
  %6 = xla_tuple %s4, %s5
  %s7 = sld [smem:[#allocation0]]
  $region38: #{basic_block_forward.4} parent=0
    _
  %s9 = ssub.s32 1, %s7
  %s10 = scalar_select 0, %s9, %s7
  // Predicated region
  $region2: #{basic_block_forward.4} parent=0 // pred_check
    _
  $region3: #{basic_block_forward.4} parent=0 // pred_check_branch
    %12 = sbr.rel (0) target = $region5
  $region4: #{basic_block_forward.4} parent=0 // pred_region
    %s13 = sadd.s32 0, 0
    %s14 = smul.u32 2, %s13
    %p15 = scmp.lt.s32.totalorder %s14, 1
    %s16 = scalar_select %p15, %s14, 1
    %s17 = smul.addr %s16, 4
    %s18 = scalar_lea.vmem %s0, %s17
    %s19 = sadd.s32 0, 0
    %s20 = smul.u32 2, %s19
  $region5: #{basic_block_forward.4} parent=0 // pred_fallthru
    _
  // Predicated region
  $region6: #{basic_block_forward.4} parent=0 // pred_check
    _
  $region7: #{basic_block_forward.4} parent=0 // pred_check_branch
    %22 = sbr.rel (0) target = $region9
  $region8: #{basic_block_forward.4} parent=0 // pred_region
    _
  $region9: #{basic_block_forward.4} parent=0 // pred_fallthru
    _
  // Predicated region
  $region10: #{basic_block_forward.4} parent=0 // pred_check
    _
  $region11: #{basic_block_forward.4} parent=0 // pred_check_branch
    %24 = sbr.rel (0) target = $region13
  $region12: #{basic_block_forward.4} parent=0 // pred_region
    _
  $region13: #{basic_block_forward.4} parent=0 // pred_fallthru
    _
  // Predicated region
  $region14: #{basic_block_forward.4} parent=0 // pred_check
    _
  $region15: #{basic_block_forward.4} parent=0 // pred_check_branch
    %26 = sbr.rel (0) target = $region17
  $region16: #{basic_block_forward.4} parent=0 // pred_region
    _
  $region17: #{basic_block_forward.4} parent=0 // pred_fallthru
    _
  %s27 = sadd.s32 0, 0
  %s28 = smul.u32 2, %s27
  %p29 = scmp.lt.s32.totalorder %s28, 1
  %s30 = scalar_select %p29, %s28, 1
  %s31 = smul.addr %s30, 4
  %s32 = scalar_lea.vmem %s0, %s31
  %s33 = sadd.s32 0, 0
  %s34 = smul.u32 2, %s33
  %p35 = scmp.lt.s32.totalorder %s34, 1
  %s36 = scalar_select %p35, %s34, 1
  %s37 = smul.addr %s36, 4
  %s38 = scalar_lea.vmem %s0, %s37
  %s39 = sadd.s32 0, 0
  %s40 = smul.u32 2, %s39
  %p41 = scmp.eq.s32.totalorder 0, 0
  // Predicated region
  $region18: #{basic_block_forward.4} parent=0 // pred_check
    %p42 = pneg %p41
  $region19: #{basic_block_forward.4} parent=0 // pred_check_branch
    %44 = sbr.rel (%p42) target = $region21
  $region20: #{basic_block_forward.4} parent=0 // pred_region
    %45 = vst [vmem:[%s4] sm:$0xff] 0.0
    %46 = vst [vmem:[%s4 + $0x8] sm:$0xff] 0.0
    %47 = vst [vmem:[%s5] sm:$0xff] 0.0
    %48 = vst [vmem:[%s5 + $0x8] sm:$0xff] 0.0
  $region21: #{basic_block_forward.4} parent=0 // pred_fallthru
    _
  %v49 = vld [vmem:[%s38] sm:$0xf]
  %v50 = vld [vmem:[%s38 + $0x4] sm:$0xf]
  %v51 = vld [vmem:[%s1] sm:$0xff]
  %v52 = vld [vmem:[%s1 + $0x8] sm:$0xff]
  %v53 = vld [vmem:[%s1 + $0x10] sm:$0xff]
  %v54 = vld [vmem:[%s1 + $0x18] sm:$0xff]
  %v55 = vld [vmem:[%s1 + $0x20] sm:$0xff]
  %v56 = vld [vmem:[%s1 + $0x28] sm:$0xff]
  %v57 = vld [vmem:[%s1 + $0x30] sm:$0xff]
  %v58 = vld [vmem:[%s1 + $0x38] sm:$0xff]
  %v59 = vld [vmem:[%s1 + $0x40] sm:$0xff]
  %v60 = vld [vmem:[%s1 + $0x48] sm:$0xff]
  %v61 = vld [vmem:[%s1 + $0x50] sm:$0xff]
  %v62 = vld [vmem:[%s1 + $0x58] sm:$0xff]
  %v63 = vld [vmem:[%s1 + $0x60] sm:$0xff]
  %v64 = vld [vmem:[%s1 + $0x68] sm:$0xff]
  %v65 = vld [vmem:[%s1 + $0x70] sm:$0xff]
  %v66 = vld [vmem:[%s1 + $0x78] sm:$0xff]
  %v67 = vld [vmem:[%s3] sm:$0x3]
  %v69 = vperm.slane %v67, 0
  %v70 = vperm.slane %v67, 1
  %v75 = vunpack.c.l.b16 %v49
  %v76 = vunpack.c.l.b16 %v50
  %v77 = vpack.c.b16 %v76, %v75
  %v95 = vunpack.c.l.b16 %v51
  %v96 = vunpack.c.h.b16 %v51
  %v97 = vunpack.c.l.b16 %v52
  %v98 = vunpack.c.h.b16 %v52
  %v99 = vunpack.c.l.b16 %v53
  %v100 = vunpack.c.h.b16 %v53
  %v101 = vunpack.c.l.b16 %v54
  %v102 = vunpack.c.h.b16 %v54
  %v103 = vunpack.c.l.b16 %v55
  %v104 = vunpack.c.h.b16 %v55
  %v105 = vunpack.c.l.b16 %v56
  %v106 = vunpack.c.h.b16 %v56
  %v107 = vunpack.c.l.b16 %v57
  %v108 = vunpack.c.h.b16 %v57
  %v109 = vunpack.c.l.b16 %v58
  %v110 = vunpack.c.h.b16 %v58
  %v111 = vunpack.c.l.b16 %v59
  %v112 = vunpack.c.h.b16 %v59
  %v113 = vunpack.c.l.b16 %v60
  %v114 = vunpack.c.h.b16 %v60
  %v115 = vunpack.c.l.b16 %v61
  %v116 = vunpack.c.h.b16 %v61
  %v117 = vunpack.c.l.b16 %v62
  %v118 = vunpack.c.h.b16 %v62
  %v119 = vunpack.c.l.b16 %v63
  %v120 = vunpack.c.h.b16 %v63
  %v121 = vunpack.c.l.b16 %v64
  %v122 = vunpack.c.h.b16 %v64
  %v123 = vunpack.c.l.b16 %v65
  %v124 = vunpack.c.h.b16 %v65
  %v125 = vunpack.c.l.b16 %v66
  %v126 = vunpack.c.h.b16 %v66
  %v127 = vpack.c.b16 %v97, %v95
  %v128 = vpack.c.b16 %v98, %v96
  %v129 = vpack.c.b16 %v101, %v99
  %v130 = vpack.c.b16 %v102, %v100
  %v131 = vpack.c.b16 %v105, %v103
  %v132 = vpack.c.b16 %v106, %v104
  %v133 = vpack.c.b16 %v109, %v107
  %v134 = vpack.c.b16 %v110, %v108
  %v135 = vpack.c.b16 %v113, %v111
  %v136 = vpack.c.b16 %v114, %v112
  %v137 = vpack.c.b16 %v117, %v115
  %v138 = vpack.c.b16 %v118, %v116
  %v139 = vpack.c.b16 %v121, %v119
  %v140 = vpack.c.b16 %v122, %v120
  %v141 = vpack.c.b16 %v125, %v123
  %v142 = vpack.c.b16 %v126, %v124
  %159 = vmatpush.bf16.msra.mxu0 %v141
  %160 = vmatpush.bf16.msra.mxu0 %v139
  %161 = vmatpush.bf16.msra.mxu0 %v137
  %162 = vmatpush.bf16.msra.mxu0 %v135
  %163 = vmatpush.bf16.msra.mxu0 %v133
  %164 = vmatpush.bf16.msra.mxu0 %v131
  %165 = vmatpush.bf16.msra.mxu0 %v129
  %166 = vmatpush.bf16.msra.mxu0 %v127
  %167 = vmatmul.bf16.gmra.mxu0 %v77
  %v168 = vpop.f32.mrf.mxu0
  %v169 = vadd.f32 %v69, %v168
  %v170 = vpop.f32.mrf.mxu0
  %v171 = vadd.f32 %v69, %v170
  %172 = vdwg.mxu0
  %173 = vmatpush.bf16.msra.mxu0 %v142
  %174 = vmatpush.bf16.msra.mxu0 %v140
  %175 = vmatpush.bf16.msra.mxu0 %v138
  %176 = vmatpush.bf16.msra.mxu0 %v136
  %177 = vmatpush.bf16.msra.mxu0 %v134
  %178 = vmatpush.bf16.msra.mxu0 %v132
  %179 = vmatpush.bf16.msra.mxu0 %v130
  %180 = vmatpush.bf16.msra.mxu0 %v128
  %181 = vmatmul.bf16.gmra.mxu0 %v77
  %v182 = vpop.f32.mrf.mxu0
  %v183 = vadd.f32 %v70, %v182
  %v184 = vpop.f32.mrf.mxu0
  %v185 = vadd.f32 %v70, %v184
  %186 = vdwg.mxu0
  %v187 = vmax.f32 %v169, 0.0
  %v188 = vmax.f32 %v183, 0.0
  %v189 = vmax.f32 %v171, 0.0
  %v190 = vmax.f32 %v185, 0.0
  %v191 = vpack.c.bf16 %v189, %v187
  %v192 = vpack.c.bf16 %v190, %v188
  %v193 = vld [vmem:[%s2] sm:$0xff]
  %v194 = vld [vmem:[%s2 + $0x8] sm:$0xff]
  %v195 = vld [vmem:[%s2 + $0x10] sm:$0xff]
  %v196 = vld [vmem:[%s2 + $0x18] sm:$0xff]
  %v197 = vld [vmem:[%s2 + $0x20] sm:$0xff]
  %v198 = vld [vmem:[%s2 + $0x28] sm:$0xff]
  %v199 = vld [vmem:[%s2 + $0x30] sm:$0xff]
  %v200 = vld [vmem:[%s2 + $0x38] sm:$0xff]
  %v201 = vld [vmem:[%s2 + $0x40] sm:$0xff]
  %v202 = vld [vmem:[%s2 + $0x48] sm:$0xff]
  %v203 = vld [vmem:[%s2 + $0x50] sm:$0xff]
  %v204 = vld [vmem:[%s2 + $0x58] sm:$0xff]
  %v205 = vld [vmem:[%s2 + $0x60] sm:$0xff]
  %v206 = vld [vmem:[%s2 + $0x68] sm:$0xff]
  %v207 = vld [vmem:[%s2 + $0x70] sm:$0xff]
  %v208 = vld [vmem:[%s2 + $0x78] sm:$0xff]
  %v209 = vld [vmem:[%s2 + $0x80] sm:$0xff]
  %v210 = vld [vmem:[%s2 + $0x88] sm:$0xff]
  %v211 = vld [vmem:[%s2 + $0x90] sm:$0xff]
  %v212 = vld [vmem:[%s2 + $0x98] sm:$0xff]
  %v213 = vld [vmem:[%s2 + $0xa0] sm:$0xff]
  %v214 = vld [vmem:[%s2 + $0xa8] sm:$0xff]
  %v215 = vld [vmem:[%s2 + $0xb0] sm:$0xff]
  %v216 = vld [vmem:[%s2 + $0xb8] sm:$0xff]
  %v217 = vld [vmem:[%s2 + $0xc0] sm:$0xff]
  %v218 = vld [vmem:[%s2 + $0xc8] sm:$0xff]
  %v219 = vld [vmem:[%s2 + $0xd0] sm:$0xff]
  %v220 = vld [vmem:[%s2 + $0xd8] sm:$0xff]
  %v221 = vld [vmem:[%s2 + $0xe0] sm:$0xff]
  %v222 = vld [vmem:[%s2 + $0xe8] sm:$0xff]
  %v223 = vld [vmem:[%s2 + $0xf0] sm:$0xff]
  %v224 = vld [vmem:[%s2 + $0xf8] sm:$0xff]
  %v257 = vunpack.c.l.b16 %v193
  %v258 = vunpack.c.h.b16 %v193
  %v259 = vunpack.c.l.b16 %v194
  %v260 = vunpack.c.h.b16 %v194
  %v261 = vunpack.c.l.b16 %v195
  %v262 = vunpack.c.h.b16 %v195
  %v263 = vunpack.c.l.b16 %v196
  %v264 = vunpack.c.h.b16 %v196
  %v265 = vunpack.c.l.b16 %v197
  %v266 = vunpack.c.h.b16 %v197
  %v267 = vunpack.c.l.b16 %v198
  %v268 = vunpack.c.h.b16 %v198
  %v269 = vunpack.c.l.b16 %v199
  %v270 = vunpack.c.h.b16 %v199
  %v271 = vunpack.c.l.b16 %v200
  %v272 = vunpack.c.h.b16 %v200
  %v273 = vunpack.c.l.b16 %v201
  %v274 = vunpack.c.h.b16 %v201
  %v275 = vunpack.c.l.b16 %v202
  %v276 = vunpack.c.h.b16 %v202
  %v277 = vunpack.c.l.b16 %v203
  %v278 = vunpack.c.h.b16 %v203
  %v279 = vunpack.c.l.b16 %v204
  %v280 = vunpack.c.h.b16 %v204
  %v281 = vunpack.c.l.b16 %v205
  %v282 = vunpack.c.h.b16 %v205
  %v283 = vunpack.c.l.b16 %v206
  %v284 = vunpack.c.h.b16 %v206
  %v285 = vunpack.c.l.b16 %v207
  %v286 = vunpack.c.h.b16 %v207
  %v287 = vunpack.c.l.b16 %v208
  %v288 = vunpack.c.h.b16 %v208
  %v289 = vunpack.c.l.b16 %v209
  %v290 = vunpack.c.h.b16 %v209
  %v291 = vunpack.c.l.b16 %v210
  %v292 = vunpack.c.h.b16 %v210
  %v293 = vunpack.c.l.b16 %v211
  %v294 = vunpack.c.h.b16 %v211
  %v295 = vunpack.c.l.b16 %v212
  %v296 = vunpack.c.h.b16 %v212
  %v297 = vunpack.c.l.b16 %v213
  %v298 = vunpack.c.h.b16 %v213
  %v299 = vunpack.c.l.b16 %v214
  %v300 = vunpack.c.h.b16 %v214
  %v301 = vunpack.c.l.b16 %v215
  %v302 = vunpack.c.h.b16 %v215
  %v303 = vunpack.c.l.b16 %v216
  %v304 = vunpack.c.h.b16 %v216
  %v305 = vunpack.c.l.b16 %v217
  %v306 = vunpack.c.h.b16 %v217
  %v307 = vunpack.c.l.b16 %v218
  %v308 = vunpack.c.h.b16 %v218
  %v309 = vunpack.c.l.b16 %v219
  %v310 = vunpack.c.h.b16 %v219
  %v311 = vunpack.c.l.b16 %v220
  %v312 = vunpack.c.h.b16 %v220
  %v313 = vunpack.c.l.b16 %v221
  %v314 = vunpack.c.h.b16 %v221
  %v315 = vunpack.c.l.b16 %v222
  %v316 = vunpack.c.h.b16 %v222
  %v317 = vunpack.c.l.b16 %v223
  %v318 = vunpack.c.h.b16 %v223
  %v319 = vunpack.c.l.b16 %v224
  %v320 = vunpack.c.h.b16 %v224
  %v321 = vpack.c.b16 %v259, %v257
  %v322 = vpack.c.b16 %v260, %v258
  %v323 = vpack.c.b16 %v263, %v261
  %v324 = vpack.c.b16 %v264, %v262
  %v325 = vpack.c.b16 %v267, %v265
  %v326 = vpack.c.b16 %v268, %v266
  %v327 = vpack.c.b16 %v271, %v269
  %v328 = vpack.c.b16 %v272, %v270
  %v329 = vpack.c.b16 %v275, %v273
  %v330 = vpack.c.b16 %v276, %v274
  %v331 = vpack.c.b16 %v279, %v277
  %v332 = vpack.c.b16 %v280, %v278
  %v333 = vpack.c.b16 %v283, %v281
  %v334 = vpack.c.b16 %v284, %v282
  %v335 = vpack.c.b16 %v287, %v285
  %v336 = vpack.c.b16 %v288, %v286
  %v337 = vpack.c.b16 %v291, %v289
  %v338 = vpack.c.b16 %v292, %v290
  %v339 = vpack.c.b16 %v295, %v293
  %v340 = vpack.c.b16 %v296, %v294
  %v341 = vpack.c.b16 %v299, %v297
  %v342 = vpack.c.b16 %v300, %v298
  %v343 = vpack.c.b16 %v303, %v301
  %v344 = vpack.c.b16 %v304, %v302
  %v345 = vpack.c.b16 %v307, %v305
  %v346 = vpack.c.b16 %v308, %v306
  %v347 = vpack.c.b16 %v311, %v309
  %v348 = vpack.c.b16 %v312, %v310
  %v349 = vpack.c.b16 %v315, %v313
  %v350 = vpack.c.b16 %v316, %v314
  %v351 = vpack.c.b16 %v319, %v317
  %v352 = vpack.c.b16 %v320, %v318
  %385 = vmatpush.bf16.msra.mxu0 %v335
  %386 = vmatpush.bf16.msra.mxu0 %v333
  %387 = vmatpush.bf16.msra.mxu0 %v331
  %388 = vmatpush.bf16.msra.mxu0 %v329
  %389 = vmatpush.bf16.msra.mxu0 %v327
  %390 = vmatpush.bf16.msra.mxu0 %v325
  %391 = vmatpush.bf16.msra.mxu0 %v323
  %392 = vmatpush.bf16.msra.mxu0 %v321
  %393 = vmatmul.bf16.gmra.mxu0 %v191
  %v394 = vpop.f32.mrf.mxu0
  %v395 = vadd.f32 0.0, %v394
  %v396 = vpop.f32.mrf.mxu0
  %v397 = vadd.f32 0.0, %v396
  %398 = vdwg.mxu0
  %399 = vmatpush.bf16.msra.mxu0 %v351
  %400 = vmatpush.bf16.msra.mxu0 %v349
  %401 = vmatpush.bf16.msra.mxu0 %v347
  %402 = vmatpush.bf16.msra.mxu0 %v345
  %403 = vmatpush.bf16.msra.mxu0 %v343
  %404 = vmatpush.bf16.msra.mxu0 %v341
  %405 = vmatpush.bf16.msra.mxu0 %v339
  %406 = vmatpush.bf16.msra.mxu0 %v337
  %407 = vmatmul.bf16.gmra.mxu0 %v192
  %v408 = vpop.f32.mrf.mxu0
  %v409 = vadd.f32 %v395, %v408
  %v410 = vpop.f32.mrf.mxu0
  %v411 = vadd.f32 %v397, %v410
  %412 = vdwg.mxu0
  %413 = vmatpush.bf16.msra.mxu0 %v336
  %414 = vmatpush.bf16.msra.mxu0 %v334
  %415 = vmatpush.bf16.msra.mxu0 %v332
  %416 = vmatpush.bf16.msra.mxu0 %v330
  %417 = vmatpush.bf16.msra.mxu0 %v328
  %418 = vmatpush.bf16.msra.mxu0 %v326
  %419 = vmatpush.bf16.msra.mxu0 %v324
  %420 = vmatpush.bf16.msra.mxu0 %v322
  %421 = vmatmul.bf16.gmra.mxu0 %v191
  %v422 = vpop.f32.mrf.mxu0
  %v423 = vadd.f32 0.0, %v422
  %v424 = vpop.f32.mrf.mxu0
  %v425 = vadd.f32 0.0, %v424
  %426 = vdwg.mxu0
  %427 = vmatpush.bf16.msra.mxu0 %v352
  %428 = vmatpush.bf16.msra.mxu0 %v350
  %429 = vmatpush.bf16.msra.mxu0 %v348
  %430 = vmatpush.bf16.msra.mxu0 %v346
  %431 = vmatpush.bf16.msra.mxu0 %v344
  %432 = vmatpush.bf16.msra.mxu0 %v342
  %433 = vmatpush.bf16.msra.mxu0 %v340
  %434 = vmatpush.bf16.msra.mxu0 %v338
  %435 = vmatmul.bf16.gmra.mxu0 %v192
  %v436 = vpop.f32.mrf.mxu0
  %v437 = vadd.f32 %v423, %v436
  %v438 = vpop.f32.mrf.mxu0
  %v439 = vadd.f32 %v425, %v438
  %440 = vdwg.mxu0
  %v441 = vld [vmem:[%s4] ss:$8 sm:$0x3]
  %v442 = vadd.f32 %v409, %v411
  %v443 = vrot.slane %v442, 4
  %v444 = vadd.f32 %v442, %v443
  %v445 = vrot.slane %v444, 2
  %v446 = vadd.f32 %v444, %v445
  %v447 = vrot.slane %v446, 1
  %v448 = vadd.f32 %v446, %v447
  %v449 = vadd.f32 %v437, %v439
  %v450 = vrot.slane %v449, 4
  %v451 = vadd.f32 %v449, %v450
  %v452 = vrot.slane %v451, 2
  %v453 = vadd.f32 %v451, %v452
  %v454 = vrot.slane %v453, 1
  %v455 = vadd.f32 %v453, %v454
  %v458 = vrot.slane %v455, 7
  %vm459 = vcmask 1040384
  %v460 = vsel %vm459, %v448, %v458
  %v462 = vadd.f32 %v441, %v460
  %v463 = vlaneseq
  %vm464 = vcmp.ge.s32.totalorder %v463, 0
  %vm465 = vcmp.lt.s32.totalorder %v463, 256
  %vm466 = vmand %vm464, %vm465
  %467 = vst.msk [vmem:[%s4] ss:$8 sm:$0x3] %vm466, %v462
  %468 = vst.msk [vmem:[%s4] ss:$8 sm:$0x0] %vm466, %v462
  %v469 = vld [vmem:[%s5] ss:$8 sm:$0x3]
  %v470 = vmul.f32 %v409, %v409
  %v471 = vmul.f32 %v437, %v437
  %v472 = vmul.f32 %v411, %v411
  %v473 = vmul.f32 %v439, %v439
  %v474 = vadd.f32 %v470, %v472
  %v475 = vrot.slane %v474, 4
  %v476 = vadd.f32 %v474, %v475
  %v477 = vrot.slane %v476, 2
  %v478 = vadd.f32 %v476, %v477
  %v479 = vrot.slane %v478, 1
  %v480 = vadd.f32 %v478, %v479
  %v481 = vadd.f32 %v471, %v473
  %v482 = vrot.slane %v481, 4
  %v483 = vadd.f32 %v481, %v482
  %v484 = vrot.slane %v483, 2
  %v485 = vadd.f32 %v483, %v484
  %v486 = vrot.slane %v485, 1
  %v487 = vadd.f32 %v485, %v486
  %v490 = vrot.slane %v487, 7
  %v491 = vsel %vm459, %v480, %v490
  %v493 = vadd.f32 %v469, %v491
  %494 = vst.msk [vmem:[%s5] ss:$8 sm:$0x3] %vm466, %v493
  %495 = vst.msk [vmem:[%s5] ss:$8 sm:$0x0] %vm466, %v493
  // Predicated region
  $region22: #{basic_block_forward.4} parent=0 // pred_check
    _
  $region23: #{basic_block_forward.4} parent=0 // pred_check_branch
    %497 = sbr.rel (0) target = $region25
  $region24: #{basic_block_forward.4} parent=0 // pred_region
    _
  $region25: #{basic_block_forward.4} parent=0 // pred_fallthru
    _
  // Predicated region
  $region26: #{basic_block_forward.4} parent=0 // pred_check
    _
  $region27: #{basic_block_forward.4} parent=0 // pred_check_branch
    %499 = sbr.rel (0) target = $region29
  $region28: #{basic_block_forward.4} parent=0 // pred_region
    _
  $region29: #{basic_block_forward.4} parent=0 // pred_fallthru
    _
  // Predicated region
  $region30: #{basic_block_forward.4} parent=0 // pred_check
    _
  $region31: #{basic_block_forward.4} parent=0 // pred_check_branch
    %501 = sbr.rel (0) target = $region33
  $region32: #{basic_block_forward.4} parent=0 // pred_region
    _
  $region33: #{basic_block_forward.4} parent=0 // pred_fallthru
    _
  // Predicated region
  $region34: #{basic_block_forward.4} parent=0 // pred_check
    _
  $region35: #{basic_block_forward.4} parent=0 // pred_check_branch
    %503 = sbr.rel (0) target = $region37
  $region36: #{basic_block_forward.4} parent=0 // pred_region
    _
  $region37: #{basic_block_forward.4} parent=0 // pred_fallthru
    _

// kernel: basic_block_forward.5
$region0: #{basic_block_forward.5}
  #allocation0 [shape = 'u32[]', space=smem, size = 0x4, offset = 0x4, fixed_abs, tag = 'smem constant byte address 0x4 - core index']
  #allocation1 [shape = 'u32[72,128]{1,0:T(1,128)}', space=vmem, size = 0x9000, scoped, tag = 'internal scratch']
  %s0 = inlined_call_operand.vmem [shape: bf16[16,128], index: 0, kind: input, shape index: {}]
  %s1 = inlined_call_operand.vmem [shape: bf16[128,256], index: 1, kind: input, shape index: {}]
  %s2 = inlined_call_operand.vmem [shape: bf16[256,256], index: 2, kind: input, shape index: {}]
  %s3 = inlined_call_operand.vmem [shape: bf16[128,256], index: 3, kind: input, shape index: {}]
  %s4 = inlined_call_operand.vmem [shape: f32[1,256], index: 4, kind: input, shape index: {}]
  %s5 = inlined_call_operand.vmem [shape: f32[1,256], index: 5, kind: input, shape index: {}]
  %s6 = inlined_call_operand.vmem [shape: f32[16,256], index: 6, kind: output, shape index: {}]
  %s7 = sld [smem:[#allocation0]]
  $region34: #{basic_block_forward.5} parent=0
    _
  %s9 = ssub.s32 1, %s7
  %s10 = scalar_select 0, %s9, %s7
  // Predicated region
  $region2: #{basic_block_forward.5} parent=0 // pred_check
    _
  $region3: #{basic_block_forward.5} parent=0 // pred_check_branch
    %12 = sbr.rel (0) target = $region5
  $region4: #{basic_block_forward.5} parent=0 // pred_region
    _
  $region5: #{basic_block_forward.5} parent=0 // pred_fallthru
    _
  // Predicated region
  $region6: #{basic_block_forward.5} parent=0 // pred_check
    _
  $region7: #{basic_block_forward.5} parent=0 // pred_check_branch
    %14 = sbr.rel (0) target = $region9
  $region8: #{basic_block_forward.5} parent=0 // pred_region
    _
  $region9: #{basic_block_forward.5} parent=0 // pred_fallthru
    _
  // Predicated region
  $region10: #{basic_block_forward.5} parent=0 // pred_check
    _
  $region11: #{basic_block_forward.5} parent=0 // pred_check_branch
    %16 = sbr.rel (0) target = $region13
  $region12: #{basic_block_forward.5} parent=0 // pred_region
    _
  $region13: #{basic_block_forward.5} parent=0 // pred_fallthru
    _
  // Predicated region
  $region14: #{basic_block_forward.5} parent=0 // pred_check
    _
  $region15: #{basic_block_forward.5} parent=0 // pred_check_branch
    %18 = sbr.rel (0) target = $region17
  $region16: #{basic_block_forward.5} parent=0 // pred_region
    _
  $region17: #{basic_block_forward.5} parent=0 // pred_fallthru
    _
  // Predicated region
  $region18: #{basic_block_forward.5} parent=0 // pred_check
    _
  $region19: #{basic_block_forward.5} parent=0 // pred_check_branch
    %20 = sbr.rel (0) target = $region21
  $region20: #{basic_block_forward.5} parent=0 // pred_region
    _
  $region21: #{basic_block_forward.5} parent=0 // pred_fallthru
    _
  // Predicated region
  $region22: #{basic_block_forward.5} parent=0 // pred_check
    _
  $region23: #{basic_block_forward.5} parent=0 // pred_check_branch
    %22 = sbr.rel (0) target = $region25
  $region24: #{basic_block_forward.5} parent=0 // pred_region
    _
  $region25: #{basic_block_forward.5} parent=0 // pred_fallthru
    _
  %v23 = vld [vmem:[%s0] sm:$0xf]
  %v24 = vld [vmem:[%s0 + $0x4] sm:$0xf]
  %v25 = vld [vmem:[%s1] sm:$0xff]
  %v26 = vld [vmem:[%s1 + $0x8] sm:$0xff]
  %v27 = vld [vmem:[%s1 + $0x10] sm:$0xff]
  %v28 = vld [vmem:[%s1 + $0x18] sm:$0xff]
  %v29 = vld [vmem:[%s1 + $0x20] sm:$0xff]
  %v30 = vld [vmem:[%s1 + $0x28] sm:$0xff]
  %v31 = vld [vmem:[%s1 + $0x30] sm:$0xff]
  %v32 = vld [vmem:[%s1 + $0x38] sm:$0xff]
  %v33 = vld [vmem:[%s1 + $0x40] sm:$0xff]
  %v34 = vld [vmem:[%s1 + $0x48] sm:$0xff]
  %v35 = vld [vmem:[%s1 + $0x50] sm:$0xff]
  %v36 = vld [vmem:[%s1 + $0x58] sm:$0xff]
  %v37 = vld [vmem:[%s1 + $0x60] sm:$0xff]
  %v38 = vld [vmem:[%s1 + $0x68] sm:$0xff]
  %v39 = vld [vmem:[%s1 + $0x70] sm:$0xff]
  %v40 = vld [vmem:[%s1 + $0x78] sm:$0xff]
  %v41 = vld [vmem:[%s4] sm:$0x3]
  %v43 = vperm.slane %v41, 0
  %v44 = vperm.slane %v41, 1
  %v49 = vunpack.c.l.b16 %v23
  %v50 = vunpack.c.l.b16 %v24
  %v51 = vpack.c.b16 %v50, %v49
  %v69 = vunpack.c.l.b16 %v25
  %v70 = vunpack.c.h.b16 %v25
  %v71 = vunpack.c.l.b16 %v26
  %v72 = vunpack.c.h.b16 %v26
  %v73 = vunpack.c.l.b16 %v27
  %v74 = vunpack.c.h.b16 %v27
  %v75 = vunpack.c.l.b16 %v28
  %v76 = vunpack.c.h.b16 %v28
  %v77 = vunpack.c.l.b16 %v29
  %v78 = vunpack.c.h.b16 %v29
  %v79 = vunpack.c.l.b16 %v30
  %v80 = vunpack.c.h.b16 %v30
  %v81 = vunpack.c.l.b16 %v31
  %v82 = vunpack.c.h.b16 %v31
  %v83 = vunpack.c.l.b16 %v32
  %v84 = vunpack.c.h.b16 %v32
  %v85 = vunpack.c.l.b16 %v33
  %v86 = vunpack.c.h.b16 %v33
  %v87 = vunpack.c.l.b16 %v34
  %v88 = vunpack.c.h.b16 %v34
  %v89 = vunpack.c.l.b16 %v35
  %v90 = vunpack.c.h.b16 %v35
  %v91 = vunpack.c.l.b16 %v36
  %v92 = vunpack.c.h.b16 %v36
  %v93 = vunpack.c.l.b16 %v37
  %v94 = vunpack.c.h.b16 %v37
  %v95 = vunpack.c.l.b16 %v38
  %v96 = vunpack.c.h.b16 %v38
  %v97 = vunpack.c.l.b16 %v39
  %v98 = vunpack.c.h.b16 %v39
  %v99 = vunpack.c.l.b16 %v40
  %v100 = vunpack.c.h.b16 %v40
  %v101 = vpack.c.b16 %v71, %v69
  %v102 = vpack.c.b16 %v72, %v70
  %v103 = vpack.c.b16 %v75, %v73
  %v104 = vpack.c.b16 %v76, %v74
  %v105 = vpack.c.b16 %v79, %v77
  %v106 = vpack.c.b16 %v80, %v78
  %v107 = vpack.c.b16 %v83, %v81
  %v108 = vpack.c.b16 %v84, %v82
  %v109 = vpack.c.b16 %v87, %v85
  %v110 = vpack.c.b16 %v88, %v86
  %v111 = vpack.c.b16 %v91, %v89
  %v112 = vpack.c.b16 %v92, %v90
  %v113 = vpack.c.b16 %v95, %v93
  %v114 = vpack.c.b16 %v96, %v94
  %v115 = vpack.c.b16 %v99, %v97
  %v116 = vpack.c.b16 %v100, %v98
  %133 = vmatpush.bf16.msra.mxu0 %v115
  %134 = vmatpush.bf16.msra.mxu0 %v113
  %135 = vmatpush.bf16.msra.mxu0 %v111
  %136 = vmatpush.bf16.msra.mxu0 %v109
  %137 = vmatpush.bf16.msra.mxu0 %v107
  %138 = vmatpush.bf16.msra.mxu0 %v105
  %139 = vmatpush.bf16.msra.mxu0 %v103
  %140 = vmatpush.bf16.msra.mxu0 %v101
  %141 = vmatmul.bf16.gmra.mxu0 %v51
  %v142 = vpop.f32.mrf.mxu0
  %v143 = vadd.f32 %v43, %v142
  %v144 = vpop.f32.mrf.mxu0
  %v145 = vadd.f32 %v43, %v144
  %146 = vdwg.mxu0
  %147 = vmatpush.bf16.msra.mxu0 %v116
  %148 = vmatpush.bf16.msra.mxu0 %v114
  %149 = vmatpush.bf16.msra.mxu0 %v112
  %150 = vmatpush.bf16.msra.mxu0 %v110
  %151 = vmatpush.bf16.msra.mxu0 %v108
  %152 = vmatpush.bf16.msra.mxu0 %v106
  %153 = vmatpush.bf16.msra.mxu0 %v104
  %154 = vmatpush.bf16.msra.mxu0 %v102
  %155 = vmatmul.bf16.gmra.mxu0 %v51
  %v156 = vpop.f32.mrf.mxu0
  %v157 = vadd.f32 %v44, %v156
  %v158 = vpop.f32.mrf.mxu0
  %v159 = vadd.f32 %v44, %v158
  %160 = vdwg.mxu0
  %v161 = vmax.f32 %v143, 0.0
  %v162 = vmax.f32 %v157, 0.0
  %v163 = vmax.f32 %v145, 0.0
  %v164 = vmax.f32 %v159, 0.0
  %v165 = vpack.c.bf16 %v163, %v161
  %v166 = vpack.c.bf16 %v164, %v162
  %v167 = vld [vmem:[%s2] sm:$0xff]
  %v168 = vld [vmem:[%s2 + $0x8] sm:$0xff]
  %v169 = vld [vmem:[%s2 + $0x10] sm:$0xff]
  %v170 = vld [vmem:[%s2 + $0x18] sm:$0xff]
  %v171 = vld [vmem:[%s2 + $0x20] sm:$0xff]
  %v172 = vld [vmem:[%s2 + $0x28] sm:$0xff]
  %v173 = vld [vmem:[%s2 + $0x30] sm:$0xff]
  %v174 = vld [vmem:[%s2 + $0x38] sm:$0xff]
  %v175 = vld [vmem:[%s2 + $0x40] sm:$0xff]
  %v176 = vld [vmem:[%s2 + $0x48] sm:$0xff]
  %v177 = vld [vmem:[%s2 + $0x50] sm:$0xff]
  %v178 = vld [vmem:[%s2 + $0x58] sm:$0xff]
  %v179 = vld [vmem:[%s2 + $0x60] sm:$0xff]
  %v180 = vld [vmem:[%s2 + $0x68] sm:$0xff]
  %v181 = vld [vmem:[%s2 + $0x70] sm:$0xff]
  %v182 = vld [vmem:[%s2 + $0x78] sm:$0xff]
  %v183 = vld [vmem:[%s2 + $0x80] sm:$0xff]
  %v184 = vld [vmem:[%s2 + $0x88] sm:$0xff]
  %v185 = vld [vmem:[%s2 + $0x90] sm:$0xff]
  %v186 = vld [vmem:[%s2 + $0x98] sm:$0xff]
  %v187 = vld [vmem:[%s2 + $0xa0] sm:$0xff]
  %v188 = vld [vmem:[%s2 + $0xa8] sm:$0xff]
  %v189 = vld [vmem:[%s2 + $0xb0] sm:$0xff]
  %v190 = vld [vmem:[%s2 + $0xb8] sm:$0xff]
  %v191 = vld [vmem:[%s2 + $0xc0] sm:$0xff]
  %v192 = vld [vmem:[%s2 + $0xc8] sm:$0xff]
  %v193 = vld [vmem:[%s2 + $0xd0] sm:$0xff]
  %v194 = vld [vmem:[%s2 + $0xd8] sm:$0xff]
  %v195 = vld [vmem:[%s2 + $0xe0] sm:$0xff]
  %v196 = vld [vmem:[%s2 + $0xe8] sm:$0xff]
  %v197 = vld [vmem:[%s2 + $0xf0] sm:$0xff]
  %v198 = vld [vmem:[%s2 + $0xf8] sm:$0xff]
  %v199 = vld [vmem:[%s5] sm:$0x3]
  %v201 = vperm.slane %v199, 0
  %v202 = vperm.slane %v199, 1
  %v237 = vunpack.c.l.b16 %v167
  %v238 = vunpack.c.h.b16 %v167
  %v239 = vunpack.c.l.b16 %v168
  %v240 = vunpack.c.h.b16 %v168
  %v241 = vunpack.c.l.b16 %v169
  %v242 = vunpack.c.h.b16 %v169
  %v243 = vunpack.c.l.b16 %v170
  %v244 = vunpack.c.h.b16 %v170
  %v245 = vunpack.c.l.b16 %v171
  %v246 = vunpack.c.h.b16 %v171
  %v247 = vunpack.c.l.b16 %v172
  %v248 = vunpack.c.h.b16 %v172
  %v249 = vunpack.c.l.b16 %v173
  %v250 = vunpack.c.h.b16 %v173
  %v251 = vunpack.c.l.b16 %v174
  %v252 = vunpack.c.h.b16 %v174
  %v253 = vunpack.c.l.b16 %v175
  %v254 = vunpack.c.h.b16 %v175
  %v255 = vunpack.c.l.b16 %v176
  %v256 = vunpack.c.h.b16 %v176
  %v257 = vunpack.c.l.b16 %v177
  %v258 = vunpack.c.h.b16 %v177
  %v259 = vunpack.c.l.b16 %v178
  %v260 = vunpack.c.h.b16 %v178
  %v261 = vunpack.c.l.b16 %v179
  %v262 = vunpack.c.h.b16 %v179
  %v263 = vunpack.c.l.b16 %v180
  %v264 = vunpack.c.h.b16 %v180
  %v265 = vunpack.c.l.b16 %v181
  %v266 = vunpack.c.h.b16 %v181
  %v267 = vunpack.c.l.b16 %v182
  %v268 = vunpack.c.h.b16 %v182
  %v269 = vunpack.c.l.b16 %v183
  %v270 = vunpack.c.h.b16 %v183
  %v271 = vunpack.c.l.b16 %v184
  %v272 = vunpack.c.h.b16 %v184
  %v273 = vunpack.c.l.b16 %v185
  %v274 = vunpack.c.h.b16 %v185
  %v275 = vunpack.c.l.b16 %v186
  %v276 = vunpack.c.h.b16 %v186
  %v277 = vunpack.c.l.b16 %v187
  %v278 = vunpack.c.h.b16 %v187
  %v279 = vunpack.c.l.b16 %v188
  %v280 = vunpack.c.h.b16 %v188
  %v281 = vunpack.c.l.b16 %v189
  %v282 = vunpack.c.h.b16 %v189
  %v283 = vunpack.c.l.b16 %v190
  %v284 = vunpack.c.h.b16 %v190
  %v285 = vunpack.c.l.b16 %v191
  %v286 = vunpack.c.h.b16 %v191
  %v287 = vunpack.c.l.b16 %v192
  %v288 = vunpack.c.h.b16 %v192
  %v289 = vunpack.c.l.b16 %v193
  %v290 = vunpack.c.h.b16 %v193
  %v291 = vunpack.c.l.b16 %v194
  %v292 = vunpack.c.h.b16 %v194
  %v293 = vunpack.c.l.b16 %v195
  %v294 = vunpack.c.h.b16 %v195
  %v295 = vunpack.c.l.b16 %v196
  %v296 = vunpack.c.h.b16 %v196
  %v297 = vunpack.c.l.b16 %v197
  %v298 = vunpack.c.h.b16 %v197
  %v299 = vunpack.c.l.b16 %v198
  %v300 = vunpack.c.h.b16 %v198
  %v301 = vpack.c.b16 %v239, %v237
  %v302 = vpack.c.b16 %v240, %v238
  %v303 = vpack.c.b16 %v243, %v241
  %v304 = vpack.c.b16 %v244, %v242
  %v305 = vpack.c.b16 %v247, %v245
  %v306 = vpack.c.b16 %v248, %v246
  %v307 = vpack.c.b16 %v251, %v249
  %v308 = vpack.c.b16 %v252, %v250
  %v309 = vpack.c.b16 %v255, %v253
  %v310 = vpack.c.b16 %v256, %v254
  %v311 = vpack.c.b16 %v259, %v257
  %v312 = vpack.c.b16 %v260, %v258
  %v313 = vpack.c.b16 %v263, %v261
  %v314 = vpack.c.b16 %v264, %v262
  %v315 = vpack.c.b16 %v267, %v265
  %v316 = vpack.c.b16 %v268, %v266
  %v317 = vpack.c.b16 %v271, %v269
  %v318 = vpack.c.b16 %v272, %v270
  %v319 = vpack.c.b16 %v275, %v273
  %v320 = vpack.c.b16 %v276, %v274
  %v321 = vpack.c.b16 %v279, %v277
  %v322 = vpack.c.b16 %v280, %v278
  %v323 = vpack.c.b16 %v283, %v281
  %v324 = vpack.c.b16 %v284, %v282
  %v325 = vpack.c.b16 %v287, %v285
  %v326 = vpack.c.b16 %v288, %v286
  %v327 = vpack.c.b16 %v291, %v289
  %v328 = vpack.c.b16 %v292, %v290
  %v329 = vpack.c.b16 %v295, %v293
  %v330 = vpack.c.b16 %v296, %v294
  %v331 = vpack.c.b16 %v299, %v297
  %v332 = vpack.c.b16 %v300, %v298
  %365 = vmatpush.bf16.msra.mxu0 %v315
  %366 = vmatpush.bf16.msra.mxu0 %v313
  %367 = vmatpush.bf16.msra.mxu0 %v311
  %368 = vmatpush.bf16.msra.mxu0 %v309
  %369 = vmatpush.bf16.msra.mxu0 %v307
  %370 = vmatpush.bf16.msra.mxu0 %v305
  %371 = vmatpush.bf16.msra.mxu0 %v303
  %372 = vmatpush.bf16.msra.mxu0 %v301
  %373 = vmatmul.bf16.gmra.mxu0 %v165
  %v374 = vpop.f32.mrf.mxu0
  %v375 = vadd.f32 %v201, %v374
  %v376 = vpop.f32.mrf.mxu0
  %v377 = vadd.f32 %v201, %v376
  %378 = vdwg.mxu0
  %379 = vmatpush.bf16.msra.mxu0 %v331
  %380 = vmatpush.bf16.msra.mxu0 %v329
  %381 = vmatpush.bf16.msra.mxu0 %v327
  %382 = vmatpush.bf16.msra.mxu0 %v325
  %383 = vmatpush.bf16.msra.mxu0 %v323
  %384 = vmatpush.bf16.msra.mxu0 %v321
  %385 = vmatpush.bf16.msra.mxu0 %v319
  %386 = vmatpush.bf16.msra.mxu0 %v317
  %387 = vmatmul.bf16.gmra.mxu0 %v166
  %v388 = vpop.f32.mrf.mxu0
  %v389 = vadd.f32 %v375, %v388
  %v390 = vpop.f32.mrf.mxu0
  %v391 = vadd.f32 %v377, %v390
  %392 = vdwg.mxu0
  %393 = vmatpush.bf16.msra.mxu0 %v316
  %394 = vmatpush.bf16.msra.mxu0 %v314
  %395 = vmatpush.bf16.msra.mxu0 %v312
  %396 = vmatpush.bf16.msra.mxu0 %v310
  %397 = vmatpush.bf16.msra.mxu0 %v308
  %398 = vmatpush.bf16.msra.mxu0 %v306
  %399 = vmatpush.bf16.msra.mxu0 %v304
  %400 = vmatpush.bf16.msra.mxu0 %v302
  %401 = vmatmul.bf16.gmra.mxu0 %v165
  %v402 = vpop.f32.mrf.mxu0
  %v403 = vadd.f32 %v202, %v402
  %v404 = vpop.f32.mrf.mxu0
  %v405 = vadd.f32 %v202, %v404
  %406 = vdwg.mxu0
  %407 = vmatpush.bf16.msra.mxu0 %v332
  %408 = vmatpush.bf16.msra.mxu0 %v330
  %409 = vmatpush.bf16.msra.mxu0 %v328
  %410 = vmatpush.bf16.msra.mxu0 %v326
  %411 = vmatpush.bf16.msra.mxu0 %v324
  %412 = vmatpush.bf16.msra.mxu0 %v322
  %413 = vmatpush.bf16.msra.mxu0 %v320
  %414 = vmatpush.bf16.msra.mxu0 %v318
  %415 = vmatmul.bf16.gmra.mxu0 %v166
  %v416 = vpop.f32.mrf.mxu0
  %v417 = vadd.f32 %v403, %v416
  %v418 = vpop.f32.mrf.mxu0
  %v419 = vadd.f32 %v405, %v418
  %420 = vdwg.mxu0
  %v421 = vld [vmem:[%s3] sm:$0xff]
  %v422 = vld [vmem:[%s3 + $0x8] sm:$0xff]
  %v423 = vld [vmem:[%s3 + $0x10] sm:$0xff]
  %v424 = vld [vmem:[%s3 + $0x18] sm:$0xff]
  %v425 = vld [vmem:[%s3 + $0x20] sm:$0xff]
  %v426 = vld [vmem:[%s3 + $0x28] sm:$0xff]
  %v427 = vld [vmem:[%s3 + $0x30] sm:$0xff]
  %v428 = vld [vmem:[%s3 + $0x38] sm:$0xff]
  %v429 = vld [vmem:[%s3 + $0x40] sm:$0xff]
  %v430 = vld [vmem:[%s3 + $0x48] sm:$0xff]
  %v431 = vld [vmem:[%s3 + $0x50] sm:$0xff]
  %v432 = vld [vmem:[%s3 + $0x58] sm:$0xff]
  %v433 = vld [vmem:[%s3 + $0x60] sm:$0xff]
  %v434 = vld [vmem:[%s3 + $0x68] sm:$0xff]
  %v435 = vld [vmem:[%s3 + $0x70] sm:$0xff]
  %v436 = vld [vmem:[%s3 + $0x78] sm:$0xff]
  %v453 = vunpack.c.l.b16 %v421
  %v454 = vunpack.c.h.b16 %v421
  %v455 = vunpack.c.l.b16 %v422
  %v456 = vunpack.c.h.b16 %v422
  %v457 = vunpack.c.l.b16 %v423
  %v458 = vunpack.c.h.b16 %v423
  %v459 = vunpack.c.l.b16 %v424
  %v460 = vunpack.c.h.b16 %v424
  %v461 = vunpack.c.l.b16 %v425
  %v462 = vunpack.c.h.b16 %v425
  %v463 = vunpack.c.l.b16 %v426
  %v464 = vunpack.c.h.b16 %v426
  %v465 = vunpack.c.l.b16 %v427
  %v466 = vunpack.c.h.b16 %v427
  %v467 = vunpack.c.l.b16 %v428
  %v468 = vunpack.c.h.b16 %v428
  %v469 = vunpack.c.l.b16 %v429
  %v470 = vunpack.c.h.b16 %v429
  %v471 = vunpack.c.l.b16 %v430
  %v472 = vunpack.c.h.b16 %v430
  %v473 = vunpack.c.l.b16 %v431
  %v474 = vunpack.c.h.b16 %v431
  %v475 = vunpack.c.l.b16 %v432
  %v476 = vunpack.c.h.b16 %v432
  %v477 = vunpack.c.l.b16 %v433
  %v478 = vunpack.c.h.b16 %v433
  %v479 = vunpack.c.l.b16 %v434
  %v480 = vunpack.c.h.b16 %v434
  %v481 = vunpack.c.l.b16 %v435
  %v482 = vunpack.c.h.b16 %v435
  %v483 = vunpack.c.l.b16 %v436
  %v484 = vunpack.c.h.b16 %v436
  %v485 = vpack.c.b16 %v455, %v453
  %v486 = vpack.c.b16 %v456, %v454
  %v487 = vpack.c.b16 %v459, %v457
  %v488 = vpack.c.b16 %v460, %v458
  %v489 = vpack.c.b16 %v463, %v461
  %v490 = vpack.c.b16 %v464, %v462
  %v491 = vpack.c.b16 %v467, %v465
  %v492 = vpack.c.b16 %v468, %v466
  %v493 = vpack.c.b16 %v471, %v469
  %v494 = vpack.c.b16 %v472, %v470
  %v495 = vpack.c.b16 %v475, %v473
  %v496 = vpack.c.b16 %v476, %v474
  %v497 = vpack.c.b16 %v479, %v477
  %v498 = vpack.c.b16 %v480, %v478
  %v499 = vpack.c.b16 %v483, %v481
  %v500 = vpack.c.b16 %v484, %v482
  %517 = vmatpush.bf16.msra.mxu0 %v499
  %518 = vmatpush.bf16.msra.mxu0 %v497
  %519 = vmatpush.bf16.msra.mxu0 %v495
  %520 = vmatpush.bf16.msra.mxu0 %v493
  %521 = vmatpush.bf16.msra.mxu0 %v491
  %522 = vmatpush.bf16.msra.mxu0 %v489
  %523 = vmatpush.bf16.msra.mxu0 %v487
  %524 = vmatpush.bf16.msra.mxu0 %v485
  %525 = vmatmul.bf16.gmra.mxu0 %v51
  %v526 = vpop.f32.mrf.mxu0
  %v527 = vadd.f32 0.0, %v526
  %v528 = vpop.f32.mrf.mxu0
  %v529 = vadd.f32 0.0, %v528
  %530 = vdwg.mxu0
  %531 = vmatpush.bf16.msra.mxu0 %v500
  %532 = vmatpush.bf16.msra.mxu0 %v498
  %533 = vmatpush.bf16.msra.mxu0 %v496
  %534 = vmatpush.bf16.msra.mxu0 %v494
  %535 = vmatpush.bf16.msra.mxu0 %v492
  %536 = vmatpush.bf16.msra.mxu0 %v490
  %537 = vmatpush.bf16.msra.mxu0 %v488
  %538 = vmatpush.bf16.msra.mxu0 %v486
  %539 = vmatmul.bf16.gmra.mxu0 %v51
  %v540 = vpop.f32.mrf.mxu0
  %v541 = vadd.f32 0.0, %v540
  %v542 = vpop.f32.mrf.mxu0
  %v543 = vadd.f32 0.0, %v542
  %544 = vdwg.mxu0
  %v545 = vadd.f32 %v389, %v527
  %v546 = vadd.f32 %v417, %v541
  %v547 = vadd.f32 %v391, %v529
  %v548 = vadd.f32 %v419, %v543
  %v549 = vmax.f32 %v545, 0.0
  %v550 = vmax.f32 %v546, 0.0
  %v551 = vmax.f32 %v547, 0.0
  %v552 = vmax.f32 %v548, 0.0
  %553 = vst [vmem:[%s6] sm:$0xff] %v549
  %554 = vst [vmem:[%s6 + $0x8] sm:$0xff] %v550
  %555 = vst [vmem:[%s6 + $0x10] sm:$0xff] %v551
  %556 = vst [vmem:[%s6 + $0x18] sm:$0xff] %v552
  // Predicated region
  $region26: #{basic_block_forward.5} parent=0 // pred_check
    _
  $region27: #{basic_block_forward.5} parent=0 // pred_check_branch
    %558 = sbr.rel (0) target = $region29
  $region28: #{basic_block_forward.5} parent=0 // pred_region
    _
  $region29: #{basic_block_forward.5} parent=0 // pred_fallthru
    _
  // Predicated region
  $region30: #{basic_block_forward.5} parent=0 // pred_check
    _
  $region31: #{basic_block_forward.5} parent=0 // pred_check_branch
    %560 = sbr.rel (0) target = $region33
  $region32: #{basic_block_forward.5} parent=0 // pred_region
    _
  $region33: #{basic_block_forward.5} parent=0 // pred_fallthru
    _

</llo_original>
